<compile_context>
chip_gen: v5e
topology: v5e:2x2
jax: 0.10.0
libtpu: 0.0.40
codegen_flags: <defaults>
</compile_context>

<pallas_src>
import jax
import jax.numpy as jnp
from jax.experimental import pallas as pl
from jax.experimental.pallas import tpu as pltpu

CHANNELS = 512   # matches the PyTorch module
LAYERS = 30      # matches the PyTorch module
COUT_PAD = 128   # lane-dense padding of the 2-channel output projection
TM_MAX = 512     # row super-tile cap (amortizes weight streaming)


def _conv_chain_kernel(x_ref, w_in_ref, b_in_ref, w_hbm, b_stack_ref,
                       w_out_ref, b_out_ref, o_ref, h_ref, wbuf, sem):
    """One grid step = one row tile; layers loop in-kernel with a 2-deep
    manual weight double buffer (bf16 weights, f32 accumulation)."""
    n_layers = w_hbm.shape[0]

    def fetch(layer, slot):
        pltpu.make_async_copy(w_hbm.at[layer], wbuf.at[slot],
                              sem.at[slot]).start()

    # Kick off the layer-0 weight DMA, overlap it with the input projection.
    fetch(0, 0)

    # In-projection (tm, cin) @ (cin, C) + b_in  (tiny, f32).
    h_ref[...] = (
        jnp.dot(x_ref[...], w_in_ref[...], preferred_element_type=jnp.float32)
        + b_in_ref[...]
    )

    @pl.loop(0, n_layers)
    def _(l):
        slot = l & 1

        # Queue the next layer's weight DMA *before* waiting on the current
        # one: the DMA engine goes back-to-back and never idles between
        # layers.  The other buffer (1-slot) was fully consumed by the
        # matmul of the previous iteration, so overwriting it is safe.
        @pl.when(l + 1 < n_layers)
        def _():
            fetch(l + 1, 1 - slot)

        # Wait for this layer's weights.
        pltpu.make_async_copy(w_hbm.at[0], wbuf.at[slot], sem.at[slot]).wait()

        # bf16 MXU matmul, f32 accumulation, f32 resident hidden state.
        h_ref[...] = (
            jnp.dot(h_ref[...].astype(jnp.bfloat16), wbuf[slot],
                    preferred_element_type=jnp.float32)
            + b_stack_ref[pl.ds(l, 1), :]
        )

    # Out-projection (C -> COUT_PAD); lane-dense (128-wide) output store.
    o_ref[...] = (
        jnp.dot(h_ref[...], w_out_ref[...], preferred_element_type=jnp.float32)
        + b_out_ref[...]
    )


def _log_softmax_kernel(x_ref, o_ref):
    x = x_ref[...]
    m = jnp.max(x, axis=-1, keepdims=True)
    s = x - m
    lse = jnp.log(jnp.sum(jnp.exp(s), axis=-1, keepdims=True))
    o_ref[...] = s - lse


def conv_chain(x_rows, w_in, b_in, w_stack_bf16, b_stack, w_out_p, b_out_p, *, tm):
    M_pad, cin = x_rows.shape
    L, C, _ = w_stack_bf16.shape
    cout_p = w_out_p.shape[1]
    assert M_pad % tm == 0

    grid = (M_pad // tm,)
    return pl.pallas_call(
        _conv_chain_kernel,
        out_shape=jax.ShapeDtypeStruct((M_pad, cout_p), jnp.float32),
        grid_spec=pltpu.PrefetchScalarGridSpec(
            num_scalar_prefetch=0,
            grid=grid,
            in_specs=[
                pl.BlockSpec((tm, cin), lambda i: (i, 0)),     # x rows
                pl.BlockSpec((cin, C), lambda i: (0, 0)),      # w_in
                pl.BlockSpec((1, C), lambda i: (0, 0)),        # b_in
                pl.BlockSpec(memory_space=pl.ANY),             # w_stack (HBM, bf16)
                pl.BlockSpec((L, C), lambda i: (0, 0)),        # b_stack (resident)
                pl.BlockSpec((C, cout_p), lambda i: (0, 0)),   # w_out (padded)
                pl.BlockSpec((1, cout_p), lambda i: (0, 0)),   # b_out (padded)
            ],
            out_specs=pl.BlockSpec((tm, cout_p), lambda i: (i, 0)),
            scratch_shapes=[
                pltpu.VMEM((tm, C), jnp.float32),        # hidden-state accumulator
                pltpu.VMEM((2, C, C), jnp.bfloat16),     # weight double buffer
                pltpu.SemaphoreType.DMA((2,)),
            ],
        ),
        compiler_params=pltpu.CompilerParams(
            dimension_semantics=("parallel",)),
    )(x_rows, w_in, b_in, w_stack_bf16, b_stack, w_out_p, b_out_p)


def log_softmax(x):
    # x: (N, F), small; process whole array in one VMEM block.
    return pl.pallas_call(
        _log_softmax_kernel,
        out_shape=jax.ShapeDtypeStruct(x.shape, jnp.float32),
    )(x)


def test_model_forward(x_nchw, params):
    w_in, b_in, w_stack, b_stack, w_out, b_out = params
    N, cin, H, W = x_nchw.shape
    M = N * H * W

    # NCHW -> rows of channels (N*H*W, cin)
    x_rows = jnp.transpose(x_nchw, (0, 2, 3, 1)).reshape(M, cin)

    # Row super-tile: up to TM_MAX rows per grid step (more rows per weight
    # pass => less weight re-streaming); pad rows so any N*H*W works and the
    # (8, 128) layout constraint is respected.
    if M >= TM_MAX:
        tm = TM_MAX
    else:
        tm = max(8, ((M + 7) // 8) * 8)
    M_pad = ((M + tm - 1) // tm) * tm
    if M_pad != M:
        x_rows = jnp.pad(x_rows, ((0, M_pad - M), (0, 0)))

    # Stream the big hidden weights as bf16 (f32 accumulation in-kernel).
    w_stack_bf16 = w_stack.astype(jnp.bfloat16)

    # Pad the 2-channel output projection to a lane-dense 128-wide store.
    cout = w_out.shape[1]
    w_out_p = jnp.pad(w_out, ((0, 0), (0, COUT_PAD - cout)))
    b_out_p = jnp.pad(b_out, ((0, 0), (0, COUT_PAD - cout)))

    out_rows = conv_chain(x_rows, w_in, b_in, w_stack_bf16, b_stack,
                          w_out_p, b_out_p, tm=tm)            # (M_pad, 128)
    out_rows = out_rows[:M, :cout]                            # (M, 2)

    # Back to NCHW then Flatten, matching torch.nn.Flatten on (N, 2, H, W).
    out_nchw = jnp.transpose(out_rows.reshape(N, H, W, cout), (0, 3, 1, 2))
    flat = out_nchw.reshape(N, cout * H * W)
    return log_softmax(flat)


def init_params(key):
    k = jax.random.split(key, 6)
    C = CHANNELS
    # Conv2d(cin, cout, 1) weight -> matmul weight of shape (cin, cout).
    w_in = jax.random.normal(k[0], (2, C), jnp.float32) / jnp.sqrt(2.0)
    b_in = 0.01 * jax.random.normal(k[1], (1, C), jnp.float32)
    w_stack = jax.random.normal(k[2], (LAYERS, C, C), jnp.float32) / jnp.sqrt(C)
    b_stack = 0.01 * jax.random.normal(k[3], (LAYERS, C), jnp.float32)
    w_out = jax.random.normal(k[4], (C, 2), jnp.float32) / jnp.sqrt(C)
    b_out = 0.01 * jax.random.normal(k[5], (1, 2), jnp.float32)
    return (w_in, b_in, w_stack, b_stack, w_out, b_out)


def reference_forward(x_nchw, params):
    """Pure-JAX f32 reference of the PyTorch forward."""
    w_in, b_in, w_stack, b_stack, w_out, b_out = params
    N, cin, H, W = x_nchw.shape
    hi = jax.lax.Precision.HIGHEST
    h = jnp.transpose(x_nchw, (0, 2, 3, 1)).reshape(N * H * W, cin)
    h = jnp.dot(h, w_in, precision=hi) + b_in
    for l in range(LAYERS):
        h = jnp.dot(h, w_stack[l], precision=hi) + b_stack[l][None, :]
    h = jnp.dot(h, w_out, precision=hi) + b_out
    flat = jnp.transpose(h.reshape(N, H, W, 2), (0, 3, 1, 2)).reshape(N, 2 * H * W)
    return jax.nn.log_softmax(flat, axis=1)


if __name__ == "__main__":
    key = jax.random.PRNGKey(0)
    pkey, xkey = jax.random.split(key)
    params = init_params(pkey)

    # Small input consistent with the module: N=2, C_in=2, H=W=8.
    x = jax.random.normal(xkey, (2, 2, 8, 8), jnp.float32)

    fwd = jax.jit(lambda xx: test_model_forward(xx, params))
    out = jax.block_until_ready(fwd(x))

    ref = reference_forward(x, params)
    assert out.shape == (2, 2 * 8 * 8)
    assert bool(jnp.all(jnp.isfinite(out)))
    # bf16 weight streaming (f32 accumulation) drifts slightly vs the f32 ref.
    assert bool(jnp.allclose(out, ref, rtol=2e-2, atol=1e-1)), "mismatch vs reference"
    print("KERNEL_OK")
</pallas_src>

<mosaic_0001>
module attributes {stable_mosaic.version = 11 : i64} {
  func.func @_conv_chain_kernel(%arg0: i32, %arg1: memref<128x2xf32, #tpu.memory_space<vmem>>, %arg2: memref<2x512xf32, #tpu.memory_space<vmem>>, %arg3: memref<1x512xf32, #tpu.memory_space<vmem>>, %arg4: memref<30x512x512xbf16, #tpu.memory_space<any>>, %arg5: memref<30x512xf32, #tpu.memory_space<vmem>>, %arg6: memref<512x128xf32, #tpu.memory_space<vmem>>, %arg7: memref<1x128xf32, #tpu.memory_space<vmem>>, %arg8: memref<128x128xf32, #tpu.memory_space<vmem>>, %arg9: memref<128x512xf32, #tpu.memory_space<vmem>>, %arg10: memref<2x512x512xbf16, #tpu.memory_space<vmem>>, %arg11: memref<2x!tpu.dma_semaphore, #tpu.memory_space<semaphore_mem>>) attributes {dimension_semantics = [#tpu.dimension_semantics<parallel>], iteration_bounds = array<i64: 1>, scalar_prefetch = 0 : i64, scratch_operands = 3 : i64, tpu.core_type = #tpu.core_type<tc>, window_params = [{transform_indices = @transform_0, window_bounds = array<i64: 128, 2>}, {pipeline_mode = #tpu.pipeline_mode<synchronous>, transform_indices = @transform_1, window_bounds = array<i64: 2, 512>}, {pipeline_mode = #tpu.pipeline_mode<synchronous>, transform_indices = @transform_2, window_bounds = array<i64: 1, 512>}, {}, {pipeline_mode = #tpu.pipeline_mode<synchronous>, transform_indices = @transform_4, window_bounds = array<i64: 30, 512>}, {pipeline_mode = #tpu.pipeline_mode<synchronous>, transform_indices = @transform_5, window_bounds = array<i64: 512, 128>}, {pipeline_mode = #tpu.pipeline_mode<synchronous>, transform_indices = @transform_6, window_bounds = array<i64: 1, 128>}, {transform_indices = @transform_7, window_bounds = array<i64: 128, 128>}]} {
    %c0_i32 = arith.constant 0 : i32
    %c0_i32_0 = arith.constant 0 : i32
    %c0_i32_1 = arith.constant 0 : i32
    %c0_i32_2 = arith.constant 0 : i32
    %c0_i32_3 = arith.constant 0 : i32
    %0 = tpu.memref_slice %arg4[%c0_i32, %c0_i32_2, %c0_i32_3] : memref<30x512x512xbf16, #tpu.memory_space<any>> -> memref<1x512x512xbf16, #tpu.memory_space<any>>
    %1 = tpu.memref_squeeze %0 : memref<1x512x512xbf16, #tpu.memory_space<any>> -> memref<512x512xbf16, #tpu.memory_space<any>>
    %c0_i32_4 = arith.constant 0 : i32
    %c0_i32_5 = arith.constant 0 : i32
    %2 = tpu.memref_slice %arg10[%c0_i32_0, %c0_i32_4, %c0_i32_5] : memref<2x512x512xbf16, #tpu.memory_space<vmem>> -> memref<1x512x512xbf16, #tpu.memory_space<vmem>>
    %3 = tpu.memref_squeeze %2 : memref<1x512x512xbf16, #tpu.memory_space<vmem>> -> memref<512x512xbf16, #tpu.memory_space<vmem>>
    %4 = tpu.memref_slice %arg11[%c0_i32_1] : memref<2x!tpu.dma_semaphore, #tpu.memory_space<semaphore_mem>> -> memref<1x!tpu.dma_semaphore, #tpu.memory_space<semaphore_mem>>
    %5 = tpu.memref_squeeze %4 : memref<1x!tpu.dma_semaphore, #tpu.memory_space<semaphore_mem>> -> memref<!tpu.dma_semaphore, #tpu.memory_space<semaphore_mem>>
    tpu.enqueue_dma source(%1 : memref<512x512xbf16, #tpu.memory_space<any>>) target(%3 : memref<512x512xbf16, #tpu.memory_space<vmem>>) target_semaphore(%5 : memref<!tpu.dma_semaphore, #tpu.memory_space<semaphore_mem>>)
    %c0 = arith.constant 0 : index
    %c0_6 = arith.constant 0 : index
    %6 = vector.load %arg1[%c0, %c0_6] : memref<128x2xf32, #tpu.memory_space<vmem>>, vector<128x2xf32>
    %c0_7 = arith.constant 0 : index
    %c0_8 = arith.constant 0 : index
    %7 = vector.load %arg2[%c0_7, %c0_8] : memref<2x512xf32, #tpu.memory_space<vmem>>, vector<2x512xf32>
    %cst = arith.constant dense<0.000000e+00> : vector<128x512xf32>
    %8 = tpu.matmul %6, %7, %cst {dimension_numbers = #tpu.dot_dimension_numbers<[1], [0], [0], [1], [0, 0, 1, 1], [], []>} : vector<128x2xf32>, vector<2x512xf32>, vector<128x512xf32> -> vector<128x512xf32>
    %c0_9 = arith.constant 0 : index
    %c0_10 = arith.constant 0 : index
    %9 = vector.load %arg3[%c0_9, %c0_10] : memref<1x512xf32, #tpu.memory_space<vmem>>, vector<1x512xf32>
    %10 = vector.broadcast %9 : vector<1x512xf32> to vector<128x512xf32>
    %11 = arith.addf %8, %10 : vector<128x512xf32>
    %c0_11 = arith.constant 0 : index
    %c0_12 = arith.constant 0 : index
    %12 = vector.load %arg9[%c0_11, %c0_12] : memref<128x512xf32, #tpu.memory_space<vmem>>, vector<128x512xf32>
    tpu.vector_store %arg9[%c0_11, %c0_12], %11 {strides = array<i32>} : memref<128x512xf32, #tpu.memory_space<vmem>>, vector<128x512xf32>,
    %c0_i32_13 = arith.constant 0 : i32
    %c30_i32 = arith.constant 30 : i32
    %13 = arith.addi %c0_i32_13, %c30_i32 : i32
    %c1_i32 = arith.constant 1 : i32
    scf.for %arg12 = %c0_i32_13 to %13 step %c1_i32  : i32 {
      %c1_i32_24 = arith.constant 1 : i32
      %21 = arith.muli %arg12, %c1_i32_24 : i32
      %c0_i32_25 = arith.constant 0 : i32
      %22 = arith.addi %c0_i32_25, %21 : i32
      %c1_i32_26 = arith.constant 1 : i32
      %23 = arith.andi %22, %c1_i32_26 : i32
      %c1_i32_27 = arith.constant 1 : i32
      %24 = arith.addi %22, %c1_i32_27 : i32
      %c30_i32_28 = arith.constant 30 : i32
      %25 = arith.cmpi slt, %24, %c30_i32_28 : i32
      %26 = arith.extui %25 : i1 to i32
      %c0_i32_29 = arith.constant 0 : i32
      %27 = arith.cmpi ne, %26, %c0_i32_29 : i32
      scf.if %27 {
        %c1_i32_43 = arith.constant 1 : i32
        %45 = arith.addi %22, %c1_i32_43 : i32
        %c1_i32_44 = arith.constant 1 : i32
        %46 = arith.subi %c1_i32_44, %23 : i32
        %c0_i32_45 = arith.constant 0 : i32
        %c0_i32_46 = arith.constant 0 : i32
        %47 = tpu.memref_slice %arg4[%45, %c0_i32_45, %c0_i32_46] : memref<30x512x512xbf16, #tpu.memory_space<any>> -> memref<1x512x512xbf16, #tpu.memory_space<any>>
        %48 = tpu.memref_squeeze %47 : memref<1x512x512xbf16, #tpu.memory_space<any>> -> memref<512x512xbf16, #tpu.memory_space<any>>
        %c0_i32_47 = arith.constant 0 : i32
        %c0_i32_48 = arith.constant 0 : i32
        %49 = tpu.memref_slice %arg10[%46, %c0_i32_47, %c0_i32_48] : memref<2x512x512xbf16, #tpu.memory_space<vmem>> -> memref<1x512x512xbf16, #tpu.memory_space<vmem>>
        %50 = tpu.memref_squeeze %49 : memref<1x512x512xbf16, #tpu.memory_space<vmem>> -> memref<512x512xbf16, #tpu.memory_space<vmem>>
        %51 = tpu.memref_slice %arg11[%46] : memref<2x!tpu.dma_semaphore, #tpu.memory_space<semaphore_mem>> -> memref<1x!tpu.dma_semaphore, #tpu.memory_space<semaphore_mem>>
        %52 = tpu.memref_squeeze %51 : memref<1x!tpu.dma_semaphore, #tpu.memory_space<semaphore_mem>> -> memref<!tpu.dma_semaphore, #tpu.memory_space<semaphore_mem>>
        tpu.enqueue_dma source(%48 : memref<512x512xbf16, #tpu.memory_space<any>>) target(%50 : memref<512x512xbf16, #tpu.memory_space<vmem>>) target_semaphore(%52 : memref<!tpu.dma_semaphore, #tpu.memory_space<semaphore_mem>>)
      } else {
      }
      %c0_i32_30 = arith.constant 0 : i32
      %c0_i32_31 = arith.constant 0 : i32
      %c0_i32_32 = arith.constant 0 : i32
      %28 = tpu.memref_slice %arg4[%c0_i32_30, %c0_i32_31, %c0_i32_32] : memref<30x512x512xbf16, #tpu.memory_space<any>> -> memref<1x512x512xbf16, #tpu.memory_space<any>>
      %29 = tpu.memref_squeeze %28 : memref<1x512x512xbf16, #tpu.memory_space<any>> -> memref<512x512xbf16, #tpu.memory_space<any>>
      %c0_i32_33 = arith.constant 0 : i32
      %c0_i32_34 = arith.constant 0 : i32
      %30 = tpu.memref_slice %arg10[%23, %c0_i32_33, %c0_i32_34] : memref<2x512x512xbf16, #tpu.memory_space<vmem>> -> memref<1x512x512xbf16, #tpu.memory_space<vmem>>
      %31 = tpu.memref_squeeze %30 : memref<1x512x512xbf16, #tpu.memory_space<vmem>> -> memref<512x512xbf16, #tpu.memory_space<vmem>>
      %32 = tpu.memref_slice %arg11[%23] : memref<2x!tpu.dma_semaphore, #tpu.memory_space<semaphore_mem>> -> memref<1x!tpu.dma_semaphore, #tpu.memory_space<semaphore_mem>>
      %33 = tpu.memref_squeeze %32 : memref<1x!tpu.dma_semaphore, #tpu.memory_space<semaphore_mem>> -> memref<!tpu.dma_semaphore, #tpu.memory_space<semaphore_mem>>
      tpu.wait_dma2 semaphore(%33 : memref<!tpu.dma_semaphore, #tpu.memory_space<semaphore_mem>>) src(%29 : memref<512x512xbf16, #tpu.memory_space<any>>) dst(%31 : memref<512x512xbf16, #tpu.memory_space<vmem>>)
      %c0_35 = arith.constant 0 : index
      %c0_36 = arith.constant 0 : index
      %34 = vector.load %arg9[%c0_35, %c0_36] : memref<128x512xf32, #tpu.memory_space<vmem>>, vector<128x512xf32>
      %35 = arith.truncf %34 : vector<128x512xf32> to vector<128x512xbf16>
      %36 = arith.index_cast %23 : i32 to index
      %c0_37 = arith.constant 0 : index
      %c0_38 = arith.constant 0 : index
      %37 = vector.load %arg10[%36, %c0_37, %c0_38] : memref<2x512x512xbf16, #tpu.memory_space<vmem>>, vector<1x512x512xbf16>
      %38 = vector.shape_cast %37 : vector<1x512x512xbf16> to vector<512x512xbf16>
      %cst_39 = arith.constant dense<0.000000e+00> : vector<128x512xf32>
      %39 = tpu.matmul %35, %38, %cst_39 {dimension_numbers = #tpu.dot_dimension_numbers<[1], [0], [0], [1], [0, 0, 1, 1], [], []>} : vector<128x512xbf16>, vector<512x512xbf16>, vector<128x512xf32> -> vector<128x512xf32>
      %40 = arith.index_cast %22 : i32 to index
      %c0_40 = arith.constant 0 : index
      %41 = vector.load %arg5[%40, %c0_40] : memref<30x512xf32, #tpu.memory_space<vmem>>, vector<1x512xf32>
      %42 = vector.broadcast %41 : vector<1x512xf32> to vector<128x512xf32>
      %43 = arith.addf %39, %42 : vector<128x512xf32>
      %c0_41 = arith.constant 0 : index
      %c0_42 = arith.constant 0 : index
      %44 = vector.load %arg9[%c0_41, %c0_42] : memref<128x512xf32, #tpu.memory_space<vmem>>, vector<128x512xf32>
      tpu.vector_store %arg9[%c0_41, %c0_42], %43 {strides = array<i32>} : memref<128x512xf32, #tpu.memory_space<vmem>>, vector<128x512xf32>,
    }
    %c30_i32_14 = arith.constant 30 : i32
    %c0_15 = arith.constant 0 : index
    %c0_16 = arith.constant 0 : index
    %14 = vector.load %arg9[%c0_15, %c0_16] : memref<128x512xf32, #tpu.memory_space<vmem>>, vector<128x512xf32>
    %c0_17 = arith.constant 0 : index
    %c0_18 = arith.constant 0 : index
    %15 = vector.load %arg6[%c0_17, %c0_18] : memref<512x128xf32, #tpu.memory_space<vmem>>, vector<512x128xf32>
    %cst_19 = arith.constant dense<0.000000e+00> : vector<128x128xf32>
    %16 = tpu.matmul %14, %15, %cst_19 {dimension_numbers = #tpu.dot_dimension_numbers<[1], [0], [0], [1], [0, 0, 1, 1], [], []>} : vector<128x512xf32>, vector<512x128xf32>, vector<128x128xf32> -> vector<128x128xf32>
    %c0_20 = arith.constant 0 : index
    %c0_21 = arith.constant 0 : index
    %17 = vector.load %arg7[%c0_20, %c0_21] : memref<1x128xf32, #tpu.memory_space<vmem>>, vector<1x128xf32>
    %18 = vector.broadcast %17 : vector<1x128xf32> to vector<128x128xf32>
    %19 = arith.addf %16, %18 : vector<128x128xf32>
    %c0_22 = arith.constant 0 : index
    %c0_23 = arith.constant 0 : index
    %20 = vector.load %arg8[%c0_22, %c0_23] : memref<128x128xf32, #tpu.memory_space<vmem>>, vector<128x128xf32>
    tpu.vector_store %arg8[%c0_22, %c0_23], %19 {strides = array<i32>} : memref<128x128xf32, #tpu.memory_space<vmem>>, vector<128x128xf32>,
    return
  }
  func.func @transform_0(%arg0: i32) -> (i32, i32) {
    %c0_i32 = arith.constant 0 : i32
    %c0_i32_0 = arith.constant 0 : i32
    return %arg0, %c0_i32 : i32, i32
  }
  func.func @transform_1(%arg0: i32) -> (i32, i32) {
    %c0_i32 = arith.constant 0 : i32
    %c0_i32_0 = arith.constant 0 : i32
    %c0_i32_1 = arith.constant 0 : i32
    return %c0_i32, %c0_i32_0 : i32, i32
  }
  func.func @transform_2(%arg0: i32) -> (i32, i32) {
    %c0_i32 = arith.constant 0 : i32
    %c0_i32_0 = arith.constant 0 : i32
    %c0_i32_1 = arith.constant 0 : i32
    return %c0_i32, %c0_i32_0 : i32, i32
  }
  func.func @transform_4(%arg0: i32) -> (i32, i32) {
    %c0_i32 = arith.constant 0 : i32
    %c0_i32_0 = arith.constant 0 : i32
    %c0_i32_1 = arith.constant 0 : i32
    return %c0_i32, %c0_i32_0 : i32, i32
  }
  func.func @transform_5(%arg0: i32) -> (i32, i32) {
    %c0_i32 = arith.constant 0 : i32
    %c0_i32_0 = arith.constant 0 : i32
    %c0_i32_1 = arith.constant 0 : i32
    return %c0_i32, %c0_i32_0 : i32, i32
  }
  func.func @transform_6(%arg0: i32) -> (i32, i32) {
    %c0_i32 = arith.constant 0 : i32
    %c0_i32_0 = arith.constant 0 : i32
    %c0_i32_1 = arith.constant 0 : i32
    return %c0_i32, %c0_i32_0 : i32, i32
  }
  func.func @transform_7(%arg0: i32) -> (i32, i32) {
    %c0_i32 = arith.constant 0 : i32
    %c0_i32_0 = arith.constant 0 : i32
    return %arg0, %c0_i32 : i32, i32
  }
}

module attributes {stable_mosaic.version = 11 : i64} {
  func.func @_log_softmax_kernel(%arg0: memref<2x128xf32, #tpu.memory_space<vmem>>, %arg1: memref<2x128xf32, #tpu.memory_space<vmem>>) attributes {dimension_semantics = [], scalar_prefetch = 0 : i64, scratch_operands = 0 : i64, tpu.core_type = #tpu.core_type<tc>} {
    %c0 = arith.constant 0 : index
    %c0_0 = arith.constant 0 : index
    %0 = vector.load %arg0[%c0, %c0_0] : memref<2x128xf32, #tpu.memory_space<vmem>>, vector<2x128xf32>
    %cst = arith.constant dense<0xFF800000> : vector<2xf32>
    %1 = vector.multi_reduction <maximumf>, %0, %cst [1] : vector<2x128xf32> to vector<2xf32>
    %2 = vector.shape_cast %1 : vector<2xf32> to vector<2x1xf32>
    %3 = vector.broadcast %2 : vector<2x1xf32> to vector<2x128xf32>
    %4 = arith.subf %0, %3 : vector<2x128xf32>
    %5 = math.exp %4 : vector<2x128xf32>
    %cst_1 = arith.constant dense<0.000000e+00> : vector<2xf32>
    %6 = vector.multi_reduction <add>, %5, %cst_1 [1] : vector<2x128xf32> to vector<2xf32>
    %7 = vector.shape_cast %6 : vector<2xf32> to vector<2x1xf32>
    %8 = math.log %7 : vector<2x1xf32>
    %9 = vector.broadcast %8 : vector<2x1xf32> to vector<2x128xf32>
    %10 = arith.subf %4, %9 : vector<2x128xf32>
    %c0_2 = arith.constant 0 : index
    %c0_3 = arith.constant 0 : index
    %11 = vector.load %arg1[%c0_2, %c0_3] : memref<2x128xf32, #tpu.memory_space<vmem>>, vector<2x128xf32>
    tpu.vector_store %arg1[%c0_2, %c0_3], %10 {strides = array<i32>} : memref<2x128xf32, #tpu.memory_space<vmem>>, vector<2x128xf32>,
    return
  }
}

</mosaic_0001>

<llo_original>
// kernel: _lambda_.3
$region0: #{_lambda_.3}
  #allocation0 [shape = 'u32[]', space=smem, size = 0x4, offset = 0x4, fixed_abs, tag = 'smem constant byte address 0x4 - core index']
  #allocation1 [shape = 'u32[72,128]{1,0:T(1,128)}', space=vmem, size = 0x9000, scoped, tag = 'internal scratch']
  %s0 = inlined_call_operand.vmem [shape: f32[2,128], index: 0, kind: input, shape index: {}]
  %s1 = inlined_call_operand.hbm [shape: f32[2,128], index: 1, kind: output, shape index: {}]
  %s2 = sld [smem:[#allocation0]]
  $region14: #{_lambda_.3} parent=0
    _
  %s4 = ssub.s32 1, %s2
  %s5 = scalar_select 0, %s4, %s2
  $region1: #{_lambda_.3} parent=0
    #allocation2 [shape = 'u8[1024]{0}', space=vmem, size = 0x400, scoped, tag = 'output window, operand 0, single buffered']
    #allocation3 [shape = 's32[1]{0}', space=sflag, size = 0x4, scoped, tag = 'scoped memory for _lambda_.3']
    %6 = vsyncpa [#allocation3], 0
    // Predicated region
    $region2: #{_lambda_.3} parent=1 // pred_check
      _
    $region3: #{_lambda_.3} parent=1 // pred_check_branch
      %8 = sbr.rel (0) target = $region5
    $region4: #{_lambda_.3} parent=1 // pred_region
      _
    $region5: #{_lambda_.3} parent=1 // pred_fallthru
      _
    %v9 = vld [vmem:[%s0] sm:$0x3]
    %vm10 = vcmask 1041408
    %v11 = vsel %vm10, %v9, -inf
    %12 = vmax.xlane.f32.xlu0 %v11
    %v13 = vpop.xlane.xlu0 %12
    %v14 = vsub.f32 %v9, %v13
    %v15 = vmul.f32 %v14, 1.442695
    %v16 = vpow.pop %v15
    %v17 = vsel %vm10, %v16, 0.0
    %18 = vadd.xlane.f32.xlu0 %v17
    %v19 = vpop.xlane.xlu0 %18
    %v20 = vlog2.pop %v19
    %v21 = vmul.f32 %v20, 0.6931472
    %v22 = vsub.f32 %v14, %v21
    %23 = vst [vmem:[#allocation2] sm:$0x3] %v22
    // Predicated region
    $region6: #{_lambda_.3} parent=1 // pred_check
      _
    $region7: #{_lambda_.3} parent=1 // pred_check_branch
      %25 = sbr.rel (0) target = $region9
    $region8: #{_lambda_.3} parent=1 // pred_region
      %27 = vsyncadd [#allocation3], 0
      %s29 = sshll.u32 [#allocation2], 4
      %s30 = int_to_ptr.vmem [resolvable:$true] %s29
      %s31 = sshll.u32 %s1, 4
      %s32 = int_to_ptr.hbm [resolvable:$true] %s31
      %34 = dma.vmem_to_hbm [thread:$0]  %s30, 32, %s32, [#allocation3]
    $region9: #{_lambda_.3} parent=1 // pred_fallthru
      _
    // Predicated region
    $region10: #{_lambda_.3} parent=1 // pred_check
      _
    $region11: #{_lambda_.3} parent=1 // pred_check_branch
      %36 = sbr.rel (0) target = $region13
    $region12: #{_lambda_.3} parent=1 // pred_region
      %38 = dma.done [#allocation3], 32
    $region13: #{_lambda_.3} parent=1 // pred_fallthru
      _
    %39 = vsyncpa [#allocation3], 1

// kernel: _lambda_.2
$region0: #{_lambda_.2}
  #allocation0 [shape = 'u32[]', space=smem, size = 0x4, offset = 0x4, fixed_abs, tag = 'smem constant byte address 0x4 - core index']
  #allocation1 [shape = 'u32[72,128]{1,0:T(1,128)}', space=vmem, size = 0x9000, scoped, tag = 'internal scratch']
  #allocation2 [shape = 'f32[128,512]{1,0:T(8,128)}', space=vmem, size = 0x40000, scoped, tag = 'scratch operand']
  #allocation3 [shape = 'bf16[2,512,512]{2,1,0:T(8,128)(2,1)}', space=vmem, size = 0x100000, scoped, tag = 'scratch operand']
  #allocation4 [shape = 's32[2]{0}', space=sflag, size = 0x8, scoped, tag = 'scratch operand']
  #allocation13 [shape = 's32[]', space=sflag, size = 0x4, offset = 0, fixed_abs, tag = 'sflag constant byte address 0x0 - dummy sync flag']
  #allocation14 [shape = 's32[]', space=sflag, size = 0x4, offset = 0, fixed_abs, tag = 'sflag constant byte address 0x0 - dummy sync flag']
  #allocation15 [shape = 'u32[]', space=smem, size = 0x4, offset = 0x44, fixed_abs, tag = 'smem constant byte address 0x44 - assertion arg 0']
  #allocation16 [shape = 'u32[]', space=smem, size = 0x4, offset = 0x48, fixed_abs, tag = 'smem constant byte address 0x48 - assertion arg 1']
  #allocation17 [shape = 's32[]', space=sflag, size = 0x4, offset = 0, fixed_abs, tag = 'sflag constant byte address 0x0 - dummy sync flag']
  #allocation18 [shape = 's32[]', space=sflag, size = 0x4, offset = 0, fixed_abs, tag = 'sflag constant byte address 0x0 - dummy sync flag']
  %s0 = inlined_call_operand.vmem [shape: f32[128,2], index: 0, kind: input, shape index: {}]
  %s1 = inlined_call_operand.hbm [shape: f32[2,512], index: 1, kind: input, shape index: {}]
  %s2 = inlined_call_operand.hbm [shape: f32[1,512], index: 2, kind: input, shape index: {}]
  %s3 = inlined_call_operand.hbm [shape: bf16[30,512,512], index: 3, kind: input, shape index: {}]
  %s4 = inlined_call_operand.hbm [shape: f32[30,512], index: 4, kind: input, shape index: {}]
  %s5 = inlined_call_operand.hbm [shape: f32[512,128], index: 5, kind: input, shape index: {}]
  %s6 = inlined_call_operand.hbm [shape: f32[1,128], index: 6, kind: input, shape index: {}]
  %s7 = inlined_call_operand.vmem [shape: f32[128,128], index: 7, kind: output, shape index: {}]
  %s8 = sld [smem:[#allocation0]]
  $region73: #{_lambda_.2} parent=0
    _
  %s10 = ssub.s32 1, %s8
  %s11 = scalar_select 0, %s10, %s8
  $region1: #{_lambda_.2} parent=0
    #allocation5 [shape = 'u8[4096]{0}', space=vmem, size = 0x1000, scoped, tag = 'input window, operand 1, single buffered']
    #allocation6 [shape = 's32[1]{0}', space=sflag, size = 0x4, scoped, tag = 'scoped memory for _lambda_.2']
    #allocation7 [shape = 'u8[2048]{0}', space=vmem, size = 0x800, scoped, tag = 'input window, operand 2, single buffered']
    #allocation8 [shape = 's32[1]{0}', space=sflag, size = 0x4, scoped, tag = 'scoped memory for _lambda_.2']
    #allocation9 [shape = 'u8[65536]{0}', space=vmem, size = 0x10000, scoped, tag = 'input window, operand 4, single buffered']
    #allocation10 [shape = 'u8[262144]{0}', space=vmem, size = 0x40000, scoped, tag = 'input window, operand 5, single buffered']
    #allocation11 [shape = 's32[1]{0}', space=sflag, size = 0x4, scoped, tag = 'scoped memory for _lambda_.2']
    #allocation12 [shape = 'u8[512]{0}', space=vmem, size = 0x400, scoped, tag = 'input window, operand 6, single buffered']
    %12 = vsyncpa [#allocation6], 0
    %13 = vsyncpa [#allocation8], 0
    %14 = vsyncpa [#allocation11], 0
    // Predicated region
    $region2: #{_lambda_.2} parent=1 // pred_check
      _
    $region3: #{_lambda_.2} parent=1 // pred_check_branch
      %16 = sbr.rel (0) target = $region5
    $region4: #{_lambda_.2} parent=1 // pred_region
      _
    $region5: #{_lambda_.2} parent=1 // pred_fallthru
      _
    // Predicated region
    $region6: #{_lambda_.2} parent=1 // pred_check
      _
    $region7: #{_lambda_.2} parent=1 // pred_check_branch
      %18 = sbr.rel (0) target = $region9
    $region8: #{_lambda_.2} parent=1 // pred_region
      %20 = vsyncadd [#allocation6], 0
      %s22 = sshll.u32 %s1, 4
      %s23 = int_to_ptr.hbm [resolvable:$true] %s22
      %s24 = sshll.u32 [#allocation5], 4
      %s25 = int_to_ptr.vmem [resolvable:$true] %s24
      %27 = dma.hbm_to_vmem [thread:$0]  %s23, 128, %s25, [#allocation6]
    $region9: #{_lambda_.2} parent=1 // pred_fallthru
      _
    // Predicated region
    $region10: #{_lambda_.2} parent=1 // pred_check
      _
    $region11: #{_lambda_.2} parent=1 // pred_check_branch
      %29 = sbr.rel (0) target = $region13
    $region12: #{_lambda_.2} parent=1 // pred_region
      %31 = vsyncadd [#allocation8], 0
      %s33 = sshll.u32 %s2, 4
      %s34 = int_to_ptr.hbm [resolvable:$true] %s33
      %s35 = sshll.u32 [#allocation7], 4
      %s36 = int_to_ptr.vmem [resolvable:$true] %s35
      %38 = dma.hbm_to_vmem [thread:$0]  %s34, 64, %s36, [#allocation8]
    $region13: #{_lambda_.2} parent=1 // pred_fallthru
      _
    // Predicated region
    $region14: #{_lambda_.2} parent=1 // pred_check
      _
    $region15: #{_lambda_.2} parent=1 // pred_check_branch
      %40 = sbr.rel (0) target = $region17
    $region16: #{_lambda_.2} parent=1 // pred_region
      %42 = vsyncadd [#allocation8], 0
      %s43 = sshll.u32 %s4, 4
      %s44 = int_to_ptr.hbm [resolvable:$true] %s43
      %s45 = sshll.u32 [#allocation9], 4
      %s46 = int_to_ptr.vmem [resolvable:$true] %s45
      %51 = dma.hbm_to_vmem [thread:$0]  %s44, 2048, %s46, [#allocation8], 512, 512, 32
    $region17: #{_lambda_.2} parent=1 // pred_fallthru
      _
    // Predicated region
    $region18: #{_lambda_.2} parent=1 // pred_check
      _
    $region19: #{_lambda_.2} parent=1 // pred_check_branch
      %53 = sbr.rel (0) target = $region21
    $region20: #{_lambda_.2} parent=1 // pred_region
      %55 = vsyncadd [#allocation11], 0
      %s56 = sshll.u32 %s5, 4
      %s57 = int_to_ptr.hbm [resolvable:$true] %s56
      %s58 = sshll.u32 [#allocation10], 4
      %s59 = int_to_ptr.vmem [resolvable:$true] %s58
      %64 = dma.hbm_to_vmem [thread:$0]  %s57, 8192, %s59, [#allocation11], 128, 128, 8
    $region21: #{_lambda_.2} parent=1 // pred_fallthru
      _
    // Predicated region
    $region22: #{_lambda_.2} parent=1 // pred_check
      _
    $region23: #{_lambda_.2} parent=1 // pred_check_branch
      %66 = sbr.rel (0) target = $region25
    $region24: #{_lambda_.2} parent=1 // pred_region
      %68 = vsyncadd [#allocation11], 0
      %s70 = sshll.u32 %s6, 4
      %s71 = int_to_ptr.hbm [resolvable:$true] %s70
      %s72 = sshll.u32 [#allocation12], 4
      %s73 = int_to_ptr.vmem [resolvable:$true] %s72
      %75 = dma.hbm_to_vmem [thread:$0]  %s71, 16, %s73, [#allocation11]
    $region25: #{_lambda_.2} parent=1 // pred_fallthru
      _
    // Predicated region
    $region26: #{_lambda_.2} parent=1 // pred_check
      _
    $region27: #{_lambda_.2} parent=1 // pred_check_branch
      %77 = sbr.rel (0) target = $region29
    $region28: #{_lambda_.2} parent=1 // pred_region
      %79 = dma.done [#allocation6], 128
    $region29: #{_lambda_.2} parent=1 // pred_fallthru
      _
    // Predicated region
    $region30: #{_lambda_.2} parent=1 // pred_check
      _
    $region31: #{_lambda_.2} parent=1 // pred_check_branch
      %81 = sbr.rel (0) target = $region33
    $region32: #{_lambda_.2} parent=1 // pred_region
      %83 = dma.done [#allocation8], 64
    $region33: #{_lambda_.2} parent=1 // pred_fallthru
      _
    // Predicated region
    $region34: #{_lambda_.2} parent=1 // pred_check
      _
    $region35: #{_lambda_.2} parent=1 // pred_check_branch
      %85 = sbr.rel (0) target = $region37
    $region36: #{_lambda_.2} parent=1 // pred_region
      %87 = dma.done [#allocation8], 2048
    $region37: #{_lambda_.2} parent=1 // pred_fallthru
      _
    // Predicated region
    $region38: #{_lambda_.2} parent=1 // pred_check
      _
    $region39: #{_lambda_.2} parent=1 // pred_check_branch
      %89 = sbr.rel (0) target = $region41
    $region40: #{_lambda_.2} parent=1 // pred_region
      %91 = dma.done [#allocation11], 8192
    $region41: #{_lambda_.2} parent=1 // pred_fallthru
      _
    // Predicated region
    $region42: #{_lambda_.2} parent=1 // pred_check
      _
    $region43: #{_lambda_.2} parent=1 // pred_check_branch
      %93 = sbr.rel (0) target = $region45
    $region44: #{_lambda_.2} parent=1 // pred_region
      %95 = dma.done [#allocation11], 16
    $region45: #{_lambda_.2} parent=1 // pred_fallthru
      _
    // Predicated region
    $region46: #{_lambda_.2} parent=1 // pred_check
      _
    $region47: #{_lambda_.2} parent=1 // pred_check_branch
      %97 = sbr.rel target = $region49
    $region48: #{_lambda_.2} parent=1 // pred_region
      %98 = sst [smem:[#allocation15]] [#allocation14]
      %99 = sst [smem:[#allocation16]] [#allocation13]
    $region49: #{_lambda_.2} parent=1 // pred_fallthru
      _
    %101 = shalt.err (0)
    %s103 = sshll.u32 %s3, 4
    %s104 = int_to_ptr.hbm [resolvable:$true] %s103
    %s105 = sshll.u32 [#allocation3], 4
    %s106 = int_to_ptr.vmem [resolvable:$true] %s105
    %108 = dma.hbm_to_vmem [thread:$0]  %s104, 16384, %s106, [#allocation4]
    %v109 = vld [vmem:[%s0] sm:$0xff]
    %v110 = vld [vmem:[%s0 + $0x8] sm:$0xff]
    %v111 = vld [vmem:[%s0 + $0x10] sm:$0xff]
    %v112 = vld [vmem:[%s0 + $0x18] sm:$0xff]
    %v113 = vld [vmem:[%s0 + $0x20] sm:$0xff]
    %v114 = vld [vmem:[%s0 + $0x28] sm:$0xff]
    %v115 = vld [vmem:[%s0 + $0x30] sm:$0xff]
    %v116 = vld [vmem:[%s0 + $0x38] sm:$0xff]
    %v117 = vld [vmem:[%s0 + $0x40] sm:$0xff]
    %v118 = vld [vmem:[%s0 + $0x48] sm:$0xff]
    %v119 = vld [vmem:[%s0 + $0x50] sm:$0xff]
    %v120 = vld [vmem:[%s0 + $0x58] sm:$0xff]
    %v121 = vld [vmem:[%s0 + $0x60] sm:$0xff]
    %v122 = vld [vmem:[%s0 + $0x68] sm:$0xff]
    %v123 = vld [vmem:[%s0 + $0x70] sm:$0xff]
    %v124 = vld [vmem:[%s0 + $0x78] sm:$0xff]
    %v125 = vld [vmem:[#allocation5] sm:$0xff]
    %v126 = vld [vmem:[#allocation7] sm:$0xf]
    %v128 = vperm.slane %v126, 0
    %v129 = vperm.slane %v126, 1
    %v130 = vperm.slane %v126, 2
    %v131 = vperm.slane %v126, 3
    %137 = vst [vmem:[#allocation1] ss:$4 sm:$0xff] %v125
    %v138 = vld.sshfl [vmem:[#allocation1] sm:$0xff pattern:$0x73625140]
    %v139 = vld.sshfl [vmem:[#allocation1 + $0x8] sm:$0xff pattern:$0x73625140]
    %v140 = vld.sshfl [vmem:[#allocation1 + $0x10] sm:$0xff pattern:$0x73625140]
    %v141 = vld.sshfl [vmem:[#allocation1 + $0x18] sm:$0xff pattern:$0x73625140]
    %vm142 = vcmask 15360
    %v144 = vsel %vm142, %v109, 0
    %v147 = vsel %vm142, %v110, 0
    %v150 = vsel %vm142, %v111, 0
    %v153 = vsel %vm142, %v112, 0
    %v156 = vsel %vm142, %v113, 0
    %v159 = vsel %vm142, %v114, 0
    %v162 = vsel %vm142, %v115, 0
    %v165 = vsel %vm142, %v116, 0
    %v168 = vsel %vm142, %v117, 0
    %v171 = vsel %vm142, %v118, 0
    %v174 = vsel %vm142, %v119, 0
    %v177 = vsel %vm142, %v120, 0
    %v180 = vsel %vm142, %v121, 0
    %v183 = vsel %vm142, %v122, 0
    %v186 = vsel %vm142, %v123, 0
    %v189 = vsel %vm142, %v124, 0
    %vm191 = vcmask 1041408
    %v192 = vsel %vm191, %v138, 0
    %v194 = vsel %vm191, %v139, 0
    %v196 = vsel %vm191, %v140, 0
    %v198 = vsel %vm191, %v141, 0
    %200 = vmatpush.msra.mxu0 0.0
    %201 = vmatpush.msra.mxu0 0.0
    %202 = vmatpush.msra.mxu0 0.0
    %203 = vmatpush.msra.mxu0 0.0
    %204 = vmatpush.msra.mxu0 0.0
    %205 = vmatpush.msra.mxu0 0.0
    %206 = vmatpush.msra.mxu0 0.0
    %207 = vmatpush.msra.mxu0 0.0
    %208 = vmatpush.msra.mxu0 0.0
    %209 = vmatpush.msra.mxu0 0.0
    %210 = vmatpush.msra.mxu0 0.0
    %211 = vmatpush.msra.mxu0 0.0
    %212 = vmatpush.msra.mxu0 0.0
    %213 = vmatpush.msra.mxu0 0.0
    %214 = vmatpush.msra.mxu0 0.0
    %215 = vmatpush.msra.mxu0 %v192
    %216 = vmatmul.f32.gmra.mxu0 %v144
    %v217 = vpop.f32.mrf.mxu0
    %v218 = vadd.f32 %v128, %v217
    %219 = vmatmul.f32.gmra.mxu0 %v147
    %v220 = vpop.f32.mrf.mxu0
    %v221 = vadd.f32 %v128, %v220
    %222 = vmatmul.f32.gmra.mxu0 %v150
    %v223 = vpop.f32.mrf.mxu0
    %v224 = vadd.f32 %v128, %v223
    %225 = vmatmul.f32.gmra.mxu0 %v153
    %v226 = vpop.f32.mrf.mxu0
    %v227 = vadd.f32 %v128, %v226
    %228 = vmatmul.f32.gmra.mxu0 %v156
    %v229 = vpop.f32.mrf.mxu0
    %v230 = vadd.f32 %v128, %v229
    %231 = vmatmul.f32.gmra.mxu0 %v159
    %v232 = vpop.f32.mrf.mxu0
    %v233 = vadd.f32 %v128, %v232
    %234 = vmatmul.f32.gmra.mxu0 %v162
    %v235 = vpop.f32.mrf.mxu0
    %v236 = vadd.f32 %v128, %v235
    %237 = vmatmul.f32.gmra.mxu0 %v165
    %v238 = vpop.f32.mrf.mxu0
    %v239 = vadd.f32 %v128, %v238
    %240 = vmatmul.f32.gmra.mxu0 %v168
    %v241 = vpop.f32.mrf.mxu0
    %v242 = vadd.f32 %v128, %v241
    %243 = vmatmul.f32.gmra.mxu0 %v171
    %v244 = vpop.f32.mrf.mxu0
    %v245 = vadd.f32 %v128, %v244
    %246 = vmatmul.f32.gmra.mxu0 %v174
    %v247 = vpop.f32.mrf.mxu0
    %v248 = vadd.f32 %v128, %v247
    %249 = vmatmul.f32.gmra.mxu0 %v177
    %v250 = vpop.f32.mrf.mxu0
    %v251 = vadd.f32 %v128, %v250
    %252 = vmatmul.f32.gmra.mxu0 %v180
    %v253 = vpop.f32.mrf.mxu0
    %v254 = vadd.f32 %v128, %v253
    %255 = vmatmul.f32.gmra.mxu0 %v183
    %v256 = vpop.f32.mrf.mxu0
    %v257 = vadd.f32 %v128, %v256
    %258 = vmatmul.f32.gmra.mxu0 %v186
    %v259 = vpop.f32.mrf.mxu0
    %v260 = vadd.f32 %v128, %v259
    %261 = vmatmul.f32.gmra.mxu0 %v189
    %v262 = vpop.f32.mrf.mxu0
    %v263 = vadd.f32 %v128, %v262
    %264 = vdwg.mxu0
    %265 = vmatpush.msra.mxu0 0.0
    %266 = vmatpush.msra.mxu0 0.0
    %267 = vmatpush.msra.mxu0 0.0
    %268 = vmatpush.msra.mxu0 0.0
    %269 = vmatpush.msra.mxu0 0.0
    %270 = vmatpush.msra.mxu0 0.0
    %271 = vmatpush.msra.mxu0 0.0
    %272 = vmatpush.msra.mxu0 0.0
    %273 = vmatpush.msra.mxu0 0.0
    %274 = vmatpush.msra.mxu0 0.0
    %275 = vmatpush.msra.mxu0 0.0
    %276 = vmatpush.msra.mxu0 0.0
    %277 = vmatpush.msra.mxu0 0.0
    %278 = vmatpush.msra.mxu0 0.0
    %279 = vmatpush.msra.mxu0 0.0
    %280 = vmatpush.msra.mxu0 %v194
    %281 = vmatmul.f32.gmra.mxu0 %v144
    %v282 = vpop.f32.mrf.mxu0
    %v283 = vadd.f32 %v129, %v282
    %284 = vmatmul.f32.gmra.mxu0 %v147
    %v285 = vpop.f32.mrf.mxu0
    %v286 = vadd.f32 %v129, %v285
    %287 = vmatmul.f32.gmra.mxu0 %v150
    %v288 = vpop.f32.mrf.mxu0
    %v289 = vadd.f32 %v129, %v288
    %290 = vmatmul.f32.gmra.mxu0 %v153
    %v291 = vpop.f32.mrf.mxu0
    %v292 = vadd.f32 %v129, %v291
    %293 = vmatmul.f32.gmra.mxu0 %v156
    %v294 = vpop.f32.mrf.mxu0
    %v295 = vadd.f32 %v129, %v294
    %296 = vmatmul.f32.gmra.mxu0 %v159
    %v297 = vpop.f32.mrf.mxu0
    %v298 = vadd.f32 %v129, %v297
    %299 = vmatmul.f32.gmra.mxu0 %v162
    %v300 = vpop.f32.mrf.mxu0
    %v301 = vadd.f32 %v129, %v300
    %302 = vmatmul.f32.gmra.mxu0 %v165
    %v303 = vpop.f32.mrf.mxu0
    %v304 = vadd.f32 %v129, %v303
    %305 = vmatmul.f32.gmra.mxu0 %v168
    %v306 = vpop.f32.mrf.mxu0
    %v307 = vadd.f32 %v129, %v306
    %308 = vmatmul.f32.gmra.mxu0 %v171
    %v309 = vpop.f32.mrf.mxu0
    %v310 = vadd.f32 %v129, %v309
    %311 = vmatmul.f32.gmra.mxu0 %v174
    %v312 = vpop.f32.mrf.mxu0
    %v313 = vadd.f32 %v129, %v312
    %314 = vmatmul.f32.gmra.mxu0 %v177
    %v315 = vpop.f32.mrf.mxu0
    %v316 = vadd.f32 %v129, %v315
    %317 = vmatmul.f32.gmra.mxu0 %v180
    %v318 = vpop.f32.mrf.mxu0
    %v319 = vadd.f32 %v129, %v318
    %320 = vmatmul.f32.gmra.mxu0 %v183
    %v321 = vpop.f32.mrf.mxu0
    %v322 = vadd.f32 %v129, %v321
    %323 = vmatmul.f32.gmra.mxu0 %v186
    %v324 = vpop.f32.mrf.mxu0
    %v325 = vadd.f32 %v129, %v324
    %326 = vmatmul.f32.gmra.mxu0 %v189
    %v327 = vpop.f32.mrf.mxu0
    %v328 = vadd.f32 %v129, %v327
    %329 = vdwg.mxu0
    %330 = vmatpush.msra.mxu0 0.0
    %331 = vmatpush.msra.mxu0 0.0
    %332 = vmatpush.msra.mxu0 0.0
    %333 = vmatpush.msra.mxu0 0.0
    %334 = vmatpush.msra.mxu0 0.0
    %335 = vmatpush.msra.mxu0 0.0
    %336 = vmatpush.msra.mxu0 0.0
    %337 = vmatpush.msra.mxu0 0.0
    %338 = vmatpush.msra.mxu0 0.0
    %339 = vmatpush.msra.mxu0 0.0
    %340 = vmatpush.msra.mxu0 0.0
    %341 = vmatpush.msra.mxu0 0.0
    %342 = vmatpush.msra.mxu0 0.0
    %343 = vmatpush.msra.mxu0 0.0
    %344 = vmatpush.msra.mxu0 0.0
    %345 = vmatpush.msra.mxu0 %v196
    %346 = vmatmul.f32.gmra.mxu0 %v144
    %v347 = vpop.f32.mrf.mxu0
    %v348 = vadd.f32 %v130, %v347
    %349 = vmatmul.f32.gmra.mxu0 %v147
    %v350 = vpop.f32.mrf.mxu0
    %v351 = vadd.f32 %v130, %v350
    %352 = vmatmul.f32.gmra.mxu0 %v150
    %v353 = vpop.f32.mrf.mxu0
    %v354 = vadd.f32 %v130, %v353
    %355 = vmatmul.f32.gmra.mxu0 %v153
    %v356 = vpop.f32.mrf.mxu0
    %v357 = vadd.f32 %v130, %v356
    %358 = vmatmul.f32.gmra.mxu0 %v156
    %v359 = vpop.f32.mrf.mxu0
    %v360 = vadd.f32 %v130, %v359
    %361 = vmatmul.f32.gmra.mxu0 %v159
    %v362 = vpop.f32.mrf.mxu0
    %v363 = vadd.f32 %v130, %v362
    %364 = vmatmul.f32.gmra.mxu0 %v162
    %v365 = vpop.f32.mrf.mxu0
    %v366 = vadd.f32 %v130, %v365
    %367 = vmatmul.f32.gmra.mxu0 %v165
    %v368 = vpop.f32.mrf.mxu0
    %v369 = vadd.f32 %v130, %v368
    %370 = vmatmul.f32.gmra.mxu0 %v168
    %v371 = vpop.f32.mrf.mxu0
    %v372 = vadd.f32 %v130, %v371
    %373 = vmatmul.f32.gmra.mxu0 %v171
    %v374 = vpop.f32.mrf.mxu0
    %v375 = vadd.f32 %v130, %v374
    %376 = vmatmul.f32.gmra.mxu0 %v174
    %v377 = vpop.f32.mrf.mxu0
    %v378 = vadd.f32 %v130, %v377
    %379 = vmatmul.f32.gmra.mxu0 %v177
    %v380 = vpop.f32.mrf.mxu0
    %v381 = vadd.f32 %v130, %v380
    %382 = vmatmul.f32.gmra.mxu0 %v180
    %v383 = vpop.f32.mrf.mxu0
    %v384 = vadd.f32 %v130, %v383
    %385 = vmatmul.f32.gmra.mxu0 %v183
    %v386 = vpop.f32.mrf.mxu0
    %v387 = vadd.f32 %v130, %v386
    %388 = vmatmul.f32.gmra.mxu0 %v186
    %v389 = vpop.f32.mrf.mxu0
    %v390 = vadd.f32 %v130, %v389
    %391 = vmatmul.f32.gmra.mxu0 %v189
    %v392 = vpop.f32.mrf.mxu0
    %v393 = vadd.f32 %v130, %v392
    %394 = vdwg.mxu0
    %395 = vmatpush.msra.mxu0 0.0
    %396 = vmatpush.msra.mxu0 0.0
    %397 = vmatpush.msra.mxu0 0.0
    %398 = vmatpush.msra.mxu0 0.0
    %399 = vmatpush.msra.mxu0 0.0
    %400 = vmatpush.msra.mxu0 0.0
    %401 = vmatpush.msra.mxu0 0.0
    %402 = vmatpush.msra.mxu0 0.0
    %403 = vmatpush.msra.mxu0 0.0
    %404 = vmatpush.msra.mxu0 0.0
    %405 = vmatpush.msra.mxu0 0.0
    %406 = vmatpush.msra.mxu0 0.0
    %407 = vmatpush.msra.mxu0 0.0
    %408 = vmatpush.msra.mxu0 0.0
    %409 = vmatpush.msra.mxu0 0.0
    %410 = vmatpush.msra.mxu0 %v198
    %411 = vmatmul.f32.gmra.mxu0 %v144
    %v412 = vpop.f32.mrf.mxu0
    %v413 = vadd.f32 %v131, %v412
    %414 = vmatmul.f32.gmra.mxu0 %v147
    %v415 = vpop.f32.mrf.mxu0
    %v416 = vadd.f32 %v131, %v415
    %417 = vmatmul.f32.gmra.mxu0 %v150
    %v418 = vpop.f32.mrf.mxu0
    %v419 = vadd.f32 %v131, %v418
    %420 = vmatmul.f32.gmra.mxu0 %v153
    %v421 = vpop.f32.mrf.mxu0
    %v422 = vadd.f32 %v131, %v421
    %423 = vmatmul.f32.gmra.mxu0 %v156
    %v424 = vpop.f32.mrf.mxu0
    %v425 = vadd.f32 %v131, %v424
    %426 = vmatmul.f32.gmra.mxu0 %v159
    %v427 = vpop.f32.mrf.mxu0
    %v428 = vadd.f32 %v131, %v427
    %429 = vmatmul.f32.gmra.mxu0 %v162
    %v430 = vpop.f32.mrf.mxu0
    %v431 = vadd.f32 %v131, %v430
    %432 = vmatmul.f32.gmra.mxu0 %v165
    %v433 = vpop.f32.mrf.mxu0
    %v434 = vadd.f32 %v131, %v433
    %435 = vmatmul.f32.gmra.mxu0 %v168
    %v436 = vpop.f32.mrf.mxu0
    %v437 = vadd.f32 %v131, %v436
    %438 = vmatmul.f32.gmra.mxu0 %v171
    %v439 = vpop.f32.mrf.mxu0
    %v440 = vadd.f32 %v131, %v439
    %441 = vmatmul.f32.gmra.mxu0 %v174
    %v442 = vpop.f32.mrf.mxu0
    %v443 = vadd.f32 %v131, %v442
    %444 = vmatmul.f32.gmra.mxu0 %v177
    %v445 = vpop.f32.mrf.mxu0
    %v446 = vadd.f32 %v131, %v445
    %447 = vmatmul.f32.gmra.mxu0 %v180
    %v448 = vpop.f32.mrf.mxu0
    %v449 = vadd.f32 %v131, %v448
    %450 = vmatmul.f32.gmra.mxu0 %v183
    %v451 = vpop.f32.mrf.mxu0
    %v452 = vadd.f32 %v131, %v451
    %453 = vmatmul.f32.gmra.mxu0 %v186
    %v454 = vpop.f32.mrf.mxu0
    %v455 = vadd.f32 %v131, %v454
    %456 = vmatmul.f32.gmra.mxu0 %v189
    %v457 = vpop.f32.mrf.mxu0
    %v458 = vadd.f32 %v131, %v457
    %459 = vdwg.mxu0
    %460 = vst [vmem:[#allocation2] sm:$0xff] %v218
    %461 = vst [vmem:[#allocation2 + $0x8] sm:$0xff] %v283
    %462 = vst [vmem:[#allocation2 + $0x10] sm:$0xff] %v348
    %463 = vst [vmem:[#allocation2 + $0x18] sm:$0xff] %v413
    %464 = vst [vmem:[#allocation2 + $0x20] sm:$0xff] %v221
    %465 = vst [vmem:[#allocation2 + $0x28] sm:$0xff] %v286
    %466 = vst [vmem:[#allocation2 + $0x30] sm:$0xff] %v351
    %467 = vst [vmem:[#allocation2 + $0x38] sm:$0xff] %v416
    %468 = vst [vmem:[#allocation2 + $0x40] sm:$0xff] %v224
    %469 = vst [vmem:[#allocation2 + $0x48] sm:$0xff] %v289
    %470 = vst [vmem:[#allocation2 + $0x50] sm:$0xff] %v354
    %471 = vst [vmem:[#allocation2 + $0x58] sm:$0xff] %v419
    %472 = vst [vmem:[#allocation2 + $0x60] sm:$0xff] %v227
    %473 = vst [vmem:[#allocation2 + $0x68] sm:$0xff] %v292
    %474 = vst [vmem:[#allocation2 + $0x70] sm:$0xff] %v357
    %475 = vst [vmem:[#allocation2 + $0x78] sm:$0xff] %v422
    %476 = vst [vmem:[#allocation2 + $0x80] sm:$0xff] %v230
    %477 = vst [vmem:[#allocation2 + $0x88] sm:$0xff] %v295
    %478 = vst [vmem:[#allocation2 + $0x90] sm:$0xff] %v360
    %479 = vst [vmem:[#allocation2 + $0x98] sm:$0xff] %v425
    %480 = vst [vmem:[#allocation2 + $0xa0] sm:$0xff] %v233
    %481 = vst [vmem:[#allocation2 + $0xa8] sm:$0xff] %v298
    %482 = vst [vmem:[#allocation2 + $0xb0] sm:$0xff] %v363
    %483 = vst [vmem:[#allocation2 + $0xb8] sm:$0xff] %v428
    %484 = vst [vmem:[#allocation2 + $0xc0] sm:$0xff] %v236
    %485 = vst [vmem:[#allocation2 + $0xc8] sm:$0xff] %v301
    %486 = vst [vmem:[#allocation2 + $0xd0] sm:$0xff] %v366
    %487 = vst [vmem:[#allocation2 + $0xd8] sm:$0xff] %v431
    %488 = vst [vmem:[#allocation2 + $0xe0] sm:$0xff] %v239
    %489 = vst [vmem:[#allocation2 + $0xe8] sm:$0xff] %v304
    %490 = vst [vmem:[#allocation2 + $0xf0] sm:$0xff] %v369
    %491 = vst [vmem:[#allocation2 + $0xf8] sm:$0xff] %v434
    %492 = vst [vmem:[#allocation2 + $0x100] sm:$0xff] %v242
    %493 = vst [vmem:[#allocation2 + $0x108] sm:$0xff] %v307
    %494 = vst [vmem:[#allocation2 + $0x110] sm:$0xff] %v372
    %495 = vst [vmem:[#allocation2 + $0x118] sm:$0xff] %v437
    %496 = vst [vmem:[#allocation2 + $0x120] sm:$0xff] %v245
    %497 = vst [vmem:[#allocation2 + $0x128] sm:$0xff] %v310
    %498 = vst [vmem:[#allocation2 + $0x130] sm:$0xff] %v375
    %499 = vst [vmem:[#allocation2 + $0x138] sm:$0xff] %v440
    %500 = vst [vmem:[#allocation2 + $0x140] sm:$0xff] %v248
    %501 = vst [vmem:[#allocation2 + $0x148] sm:$0xff] %v313
    %502 = vst [vmem:[#allocation2 + $0x150] sm:$0xff] %v378
    %503 = vst [vmem:[#allocation2 + $0x158] sm:$0xff] %v443
    %504 = vst [vmem:[#allocation2 + $0x160] sm:$0xff] %v251
    %505 = vst [vmem:[#allocation2 + $0x168] sm:$0xff] %v316
    %506 = vst [vmem:[#allocation2 + $0x170] sm:$0xff] %v381
    %507 = vst [vmem:[#allocation2 + $0x178] sm:$0xff] %v446
    %508 = vst [vmem:[#allocation2 + $0x180] sm:$0xff] %v254
    %509 = vst [vmem:[#allocation2 + $0x188] sm:$0xff] %v319
    %510 = vst [vmem:[#allocation2 + $0x190] sm:$0xff] %v384
    %511 = vst [vmem:[#allocation2 + $0x198] sm:$0xff] %v449
    %512 = vst [vmem:[#allocation2 + $0x1a0] sm:$0xff] %v257
    %513 = vst [vmem:[#allocation2 + $0x1a8] sm:$0xff] %v322
    %514 = vst [vmem:[#allocation2 + $0x1b0] sm:$0xff] %v387
    %515 = vst [vmem:[#allocation2 + $0x1b8] sm:$0xff] %v452
    %516 = vst [vmem:[#allocation2 + $0x1c0] sm:$0xff] %v260
    %517 = vst [vmem:[#allocation2 + $0x1c8] sm:$0xff] %v325
    %518 = vst [vmem:[#allocation2 + $0x1d0] sm:$0xff] %v390
    %519 = vst [vmem:[#allocation2 + $0x1d8] sm:$0xff] %v455
    %520 = vst [vmem:[#allocation2 + $0x1e0] sm:$0xff] %v263
    %521 = vst [vmem:[#allocation2 + $0x1e8] sm:$0xff] %v328
    %522 = vst [vmem:[#allocation2 + $0x1f0] sm:$0xff] %v393
    %523 = vst [vmem:[#allocation2 + $0x1f8] sm:$0xff] %v458
    loop: start=0, step=1, limit=30
    $region50: #{_lambda_.2} parent=1 // loop_pre_header
      _
    $region51: #{_lambda_.2} parent=1 // loop_header
      %s525 = sphi 0, %s529
      %p526 = scmp.ge.s32.totalorder %s525, 30
    $region52: #{_lambda_.2} parent=1 // loop_header_branch
      %528 = sbr.rel (%p526) target = $region56
    $region53: #{_lambda_.2} parent=1 // loop_body
      %s530 = sand.u32 %s525, 1
      %s531 = sadd.s32 %s525, 1
      %p532 = scmp.lt.s32.totalorder %s531, 30
      // Predicated region
      $region57: #{_lambda_.2} parent=53 // pred_check
        %p533 = pneg %p532
      $region58: #{_lambda_.2} parent=53 // pred_check_branch
        %535 = sbr.rel (%p533) target = $region60
      $region59: #{_lambda_.2} parent=53 // pred_region
        %s536 = ssub.s32 1, %s530
        %s537 = smul.u32 %s531, 256
        %s538 = smul.addr %s537, 4
        %s539 = scalar_lea.hbm %s3, %s538
        %s540 = smul.u32 %s536, 256
        %s541 = smul.addr %s540, 4
        %s542 = scalar_lea.vmem [#allocation3], %s541
        %s543 = scalar_lea.sflag [#allocation4], %s536
        // Predicated region
        $region61: #{_lambda_.2} parent=59 // pred_check
          _
        $region62: #{_lambda_.2} parent=59 // pred_check_branch
          %545 = sbr.rel target = $region64
        $region63: #{_lambda_.2} parent=59 // pred_region
          %546 = sst [smem:[#allocation15]] [#allocation18]
          %547 = sst [smem:[#allocation16]] [#allocation17]
        $region64: #{_lambda_.2} parent=59 // pred_fallthru
          _
        %549 = shalt.err (0)
        %s551 = sshll.u32 %s539, 4
        %s552 = int_to_ptr.hbm [resolvable:$true] %s551
        %s553 = sshll.u32 %s542, 4
        %s554 = int_to_ptr.vmem [resolvable:$true] %s553
        %556 = dma.hbm_to_vmem [thread:$0]  %s552, 16384, %s554, %s543
      $region60: #{_lambda_.2} parent=53 // pred_fallthru
        _
      %s557 = smul.u32 %s530, 256
      %s558 = smul.addr %s557, 4
      %s559 = scalar_lea.vmem [#allocation3], %s558
      %s560 = scalar_lea.sflag [#allocation4], %s530
      %s561 = smul.u32 4, 64
      %s562 = smul.u32 %s561, 4
      %s563 = sshll.u32 %s562, 4
      %564 = dma.done %s560, %s563
      %v565 = vld [vmem:[#allocation2] sm:$0xff]
      %v566 = vld [vmem:[#allocation2 + $0x8] sm:$0xff]
      %v567 = vld [vmem:[#allocation2 + $0x10] sm:$0xff]
      %v568 = vld [vmem:[#allocation2 + $0x18] sm:$0xff]
      %v569 = vld [vmem:[#allocation2 + $0x20] sm:$0xff]
      %v570 = vld [vmem:[#allocation2 + $0x28] sm:$0xff]
      %v571 = vld [vmem:[#allocation2 + $0x30] sm:$0xff]
      %v572 = vld [vmem:[#allocation2 + $0x38] sm:$0xff]
      %v573 = vld [vmem:[#allocation2 + $0x40] sm:$0xff]
      %v574 = vld [vmem:[#allocation2 + $0x48] sm:$0xff]
      %v575 = vld [vmem:[#allocation2 + $0x50] sm:$0xff]
      %v576 = vld [vmem:[#allocation2 + $0x58] sm:$0xff]
      %v577 = vld [vmem:[#allocation2 + $0x60] sm:$0xff]
      %v578 = vld [vmem:[#allocation2 + $0x68] sm:$0xff]
      %v579 = vld [vmem:[#allocation2 + $0x70] sm:$0xff]
      %v580 = vld [vmem:[#allocation2 + $0x78] sm:$0xff]
      %v581 = vld [vmem:[#allocation2 + $0x80] sm:$0xff]
      %v582 = vld [vmem:[#allocation2 + $0x88] sm:$0xff]
      %v583 = vld [vmem:[#allocation2 + $0x90] sm:$0xff]
      %v584 = vld [vmem:[#allocation2 + $0x98] sm:$0xff]
      %v585 = vld [vmem:[#allocation2 + $0xa0] sm:$0xff]
      %v586 = vld [vmem:[#allocation2 + $0xa8] sm:$0xff]
      %v587 = vld [vmem:[#allocation2 + $0xb0] sm:$0xff]
      %v588 = vld [vmem:[#allocation2 + $0xb8] sm:$0xff]
      %v589 = vld [vmem:[#allocation2 + $0xc0] sm:$0xff]
      %v590 = vld [vmem:[#allocation2 + $0xc8] sm:$0xff]
      %v591 = vld [vmem:[#allocation2 + $0xd0] sm:$0xff]
      %v592 = vld [vmem:[#allocation2 + $0xd8] sm:$0xff]
      %v593 = vld [vmem:[#allocation2 + $0xe0] sm:$0xff]
      %v594 = vld [vmem:[#allocation2 + $0xe8] sm:$0xff]
      %v595 = vld [vmem:[#allocation2 + $0xf0] sm:$0xff]
      %v596 = vld [vmem:[#allocation2 + $0xf8] sm:$0xff]
      %v597 = vld [vmem:[#allocation2 + $0x100] sm:$0xff]
      %v598 = vld [vmem:[#allocation2 + $0x108] sm:$0xff]
      %v599 = vld [vmem:[#allocation2 + $0x110] sm:$0xff]
      %v600 = vld [vmem:[#allocation2 + $0x118] sm:$0xff]
      %v601 = vld [vmem:[#allocation2 + $0x120] sm:$0xff]
      %v602 = vld [vmem:[#allocation2 + $0x128] sm:$0xff]
      %v603 = vld [vmem:[#allocation2 + $0x130] sm:$0xff]
      %v604 = vld [vmem:[#allocation2 + $0x138] sm:$0xff]
      %v605 = vld [vmem:[#allocation2 + $0x140] sm:$0xff]
      %v606 = vld [vmem:[#allocation2 + $0x148] sm:$0xff]
      %v607 = vld [vmem:[#allocation2 + $0x150] sm:$0xff]
      %v608 = vld [vmem:[#allocation2 + $0x158] sm:$0xff]
      %v609 = vld [vmem:[#allocation2 + $0x160] sm:$0xff]
      %v610 = vld [vmem:[#allocation2 + $0x168] sm:$0xff]
      %v611 = vld [vmem:[#allocation2 + $0x170] sm:$0xff]
      %v612 = vld [vmem:[#allocation2 + $0x178] sm:$0xff]
      %v613 = vld [vmem:[#allocation2 + $0x180] sm:$0xff]
      %v614 = vld [vmem:[#allocation2 + $0x188] sm:$0xff]
      %v615 = vld [vmem:[#allocation2 + $0x190] sm:$0xff]
      %v616 = vld [vmem:[#allocation2 + $0x198] sm:$0xff]
      %v617 = vld [vmem:[#allocation2 + $0x1a0] sm:$0xff]
      %v618 = vld [vmem:[#allocation2 + $0x1a8] sm:$0xff]
      %v619 = vld [vmem:[#allocation2 + $0x1b0] sm:$0xff]
      %v620 = vld [vmem:[#allocation2 + $0x1b8] sm:$0xff]
      %v621 = vld [vmem:[#allocation2 + $0x1c0] sm:$0xff]
      %v622 = vld [vmem:[#allocation2 + $0x1c8] sm:$0xff]
      %v623 = vld [vmem:[#allocation2 + $0x1d0] sm:$0xff]
      %v624 = vld [vmem:[#allocation2 + $0x1d8] sm:$0xff]
      %v625 = vld [vmem:[#allocation2 + $0x1e0] sm:$0xff]
      %v626 = vld [vmem:[#allocation2 + $0x1e8] sm:$0xff]
      %v627 = vld [vmem:[#allocation2 + $0x1f0] sm:$0xff]
      %v628 = vld [vmem:[#allocation2 + $0x1f8] sm:$0xff]
      %v629 = vpack.c.bf16 %v569, %v565
      %v630 = vpack.c.bf16 %v570, %v566
      %v631 = vpack.c.bf16 %v571, %v567
      %v632 = vpack.c.bf16 %v572, %v568
      %v633 = vpack.c.bf16 %v577, %v573
      %v634 = vpack.c.bf16 %v578, %v574
      %v635 = vpack.c.bf16 %v579, %v575
      %v636 = vpack.c.bf16 %v580, %v576
      %v637 = vpack.c.bf16 %v585, %v581
      %v638 = vpack.c.bf16 %v586, %v582
      %v639 = vpack.c.bf16 %v587, %v583
      %v640 = vpack.c.bf16 %v588, %v584
      %v641 = vpack.c.bf16 %v593, %v589
      %v642 = vpack.c.bf16 %v594, %v590
      %v643 = vpack.c.bf16 %v595, %v591
      %v644 = vpack.c.bf16 %v596, %v592
      %v645 = vpack.c.bf16 %v601, %v597
      %v646 = vpack.c.bf16 %v602, %v598
      %v647 = vpack.c.bf16 %v603, %v599
      %v648 = vpack.c.bf16 %v604, %v600
      %v649 = vpack.c.bf16 %v609, %v605
      %v650 = vpack.c.bf16 %v610, %v606
      %v651 = vpack.c.bf16 %v611, %v607
      %v652 = vpack.c.bf16 %v612, %v608
      %v653 = vpack.c.bf16 %v617, %v613
      %v654 = vpack.c.bf16 %v618, %v614
      %v655 = vpack.c.bf16 %v619, %v615
      %v656 = vpack.c.bf16 %v620, %v616
      %v657 = vpack.c.bf16 %v625, %v621
      %v658 = vpack.c.bf16 %v626, %v622
      %v659 = vpack.c.bf16 %v627, %v623
      %v660 = vpack.c.bf16 %v628, %v624
      %v661 = vld [vmem:[%s559] sm:$0xff]
      %v662 = vld [vmem:[%s559 + $0x8] sm:$0xff]
      %v663 = vld [vmem:[%s559 + $0x10] sm:$0xff]
      %v664 = vld [vmem:[%s559 + $0x18] sm:$0xff]
      %v665 = vld [vmem:[%s559 + $0x20] sm:$0xff]
      %v666 = vld [vmem:[%s559 + $0x28] sm:$0xff]
      %v667 = vld [vmem:[%s559 + $0x30] sm:$0xff]
      %v668 = vld [vmem:[%s559 + $0x38] sm:$0xff]
      %v669 = vld [vmem:[%s559 + $0x40] sm:$0xff]
      %v670 = vld [vmem:[%s559 + $0x48] sm:$0xff]
      %v671 = vld [vmem:[%s559 + $0x50] sm:$0xff]
      %v672 = vld [vmem:[%s559 + $0x58] sm:$0xff]
      %v673 = vld [vmem:[%s559 + $0x60] sm:$0xff]
      %v674 = vld [vmem:[%s559 + $0x68] sm:$0xff]
      %v675 = vld [vmem:[%s559 + $0x70] sm:$0xff]
      %v676 = vld [vmem:[%s559 + $0x78] sm:$0xff]
      %v677 = vld [vmem:[%s559 + $0x80] sm:$0xff]
      %v678 = vld [vmem:[%s559 + $0x88] sm:$0xff]
      %v679 = vld [vmem:[%s559 + $0x90] sm:$0xff]
      %v680 = vld [vmem:[%s559 + $0x98] sm:$0xff]
      %v681 = vld [vmem:[%s559 + $0xa0] sm:$0xff]
      %v682 = vld [vmem:[%s559 + $0xa8] sm:$0xff]
      %v683 = vld [vmem:[%s559 + $0xb0] sm:$0xff]
      %v684 = vld [vmem:[%s559 + $0xb8] sm:$0xff]
      %v685 = vld [vmem:[%s559 + $0xc0] sm:$0xff]
      %v686 = vld [vmem:[%s559 + $0xc8] sm:$0xff]
      %v687 = vld [vmem:[%s559 + $0xd0] sm:$0xff]
      %v688 = vld [vmem:[%s559 + $0xd8] sm:$0xff]
      %v689 = vld [vmem:[%s559 + $0xe0] sm:$0xff]
      %v690 = vld [vmem:[%s559 + $0xe8] sm:$0xff]
      %v691 = vld [vmem:[%s559 + $0xf0] sm:$0xff]
      %v692 = vld [vmem:[%s559 + $0xf8] sm:$0xff]
      %v693 = vld [vmem:[%s559 + $0x100] sm:$0xff]
      %v694 = vld [vmem:[%s559 + $0x108] sm:$0xff]
      %v695 = vld [vmem:[%s559 + $0x110] sm:$0xff]
      %v696 = vld [vmem:[%s559 + $0x118] sm:$0xff]
      %v697 = vld [vmem:[%s559 + $0x120] sm:$0xff]
      %v698 = vld [vmem:[%s559 + $0x128] sm:$0xff]
      %v699 = vld [vmem:[%s559 + $0x130] sm:$0xff]
      %v700 = vld [vmem:[%s559 + $0x138] sm:$0xff]
      %v701 = vld [vmem:[%s559 + $0x140] sm:$0xff]
      %v702 = vld [vmem:[%s559 + $0x148] sm:$0xff]
      %v703 = vld [vmem:[%s559 + $0x150] sm:$0xff]
      %v704 = vld [vmem:[%s559 + $0x158] sm:$0xff]
      %v705 = vld [vmem:[%s559 + $0x160] sm:$0xff]
      %v706 = vld [vmem:[%s559 + $0x168] sm:$0xff]
      %v707 = vld [vmem:[%s559 + $0x170] sm:$0xff]
      %v708 = vld [vmem:[%s559 + $0x178] sm:$0xff]
      %v709 = vld [vmem:[%s559 + $0x180] sm:$0xff]
      %v710 = vld [vmem:[%s559 + $0x188] sm:$0xff]
      %v711 = vld [vmem:[%s559 + $0x190] sm:$0xff]
      %v712 = vld [vmem:[%s559 + $0x198] sm:$0xff]
      %v713 = vld [vmem:[%s559 + $0x1a0] sm:$0xff]
      %v714 = vld [vmem:[%s559 + $0x1a8] sm:$0xff]
      %v715 = vld [vmem:[%s559 + $0x1b0] sm:$0xff]
      %v716 = vld [vmem:[%s559 + $0x1b8] sm:$0xff]
      %v717 = vld [vmem:[%s559 + $0x1c0] sm:$0xff]
      %v718 = vld [vmem:[%s559 + $0x1c8] sm:$0xff]
      %v719 = vld [vmem:[%s559 + $0x1d0] sm:$0xff]
      %v720 = vld [vmem:[%s559 + $0x1d8] sm:$0xff]
      %v721 = vld [vmem:[%s559 + $0x1e0] sm:$0xff]
      %v722 = vld [vmem:[%s559 + $0x1e8] sm:$0xff]
      %v723 = vld [vmem:[%s559 + $0x1f0] sm:$0xff]
      %v724 = vld [vmem:[%s559 + $0x1f8] sm:$0xff]
      %v725 = vld [vmem:[%s559 + $0x200] sm:$0xff]
      %v726 = vld [vmem:[%s559 + $0x208] sm:$0xff]
      %v727 = vld [vmem:[%s559 + $0x210] sm:$0xff]
      %v728 = vld [vmem:[%s559 + $0x218] sm:$0xff]
      %v729 = vld [vmem:[%s559 + $0x220] sm:$0xff]
      %v730 = vld [vmem:[%s559 + $0x228] sm:$0xff]
      %v731 = vld [vmem:[%s559 + $0x230] sm:$0xff]
      %v732 = vld [vmem:[%s559 + $0x238] sm:$0xff]
      %v733 = vld [vmem:[%s559 + $0x240] sm:$0xff]
      %v734 = vld [vmem:[%s559 + $0x248] sm:$0xff]
      %v735 = vld [vmem:[%s559 + $0x250] sm:$0xff]
      %v736 = vld [vmem:[%s559 + $0x258] sm:$0xff]
      %v737 = vld [vmem:[%s559 + $0x260] sm:$0xff]
      %v738 = vld [vmem:[%s559 + $0x268] sm:$0xff]
      %v739 = vld [vmem:[%s559 + $0x270] sm:$0xff]
      %v740 = vld [vmem:[%s559 + $0x278] sm:$0xff]
      %v741 = vld [vmem:[%s559 + $0x280] sm:$0xff]
      %v742 = vld [vmem:[%s559 + $0x288] sm:$0xff]
      %v743 = vld [vmem:[%s559 + $0x290] sm:$0xff]
      %v744 = vld [vmem:[%s559 + $0x298] sm:$0xff]
      %v745 = vld [vmem:[%s559 + $0x2a0] sm:$0xff]
      %v746 = vld [vmem:[%s559 + $0x2a8] sm:$0xff]
      %v747 = vld [vmem:[%s559 + $0x2b0] sm:$0xff]
      %v748 = vld [vmem:[%s559 + $0x2b8] sm:$0xff]
      %v749 = vld [vmem:[%s559 + $0x2c0] sm:$0xff]
      %v750 = vld [vmem:[%s559 + $0x2c8] sm:$0xff]
      %v751 = vld [vmem:[%s559 + $0x2d0] sm:$0xff]
      %v752 = vld [vmem:[%s559 + $0x2d8] sm:$0xff]
      %v753 = vld [vmem:[%s559 + $0x2e0] sm:$0xff]
      %v754 = vld [vmem:[%s559 + $0x2e8] sm:$0xff]
      %v755 = vld [vmem:[%s559 + $0x2f0] sm:$0xff]
      %v756 = vld [vmem:[%s559 + $0x2f8] sm:$0xff]
      %v757 = vld [vmem:[%s559 + $0x300] sm:$0xff]
      %v758 = vld [vmem:[%s559 + $0x308] sm:$0xff]
      %v759 = vld [vmem:[%s559 + $0x310] sm:$0xff]
      %v760 = vld [vmem:[%s559 + $0x318] sm:$0xff]
      %v761 = vld [vmem:[%s559 + $0x320] sm:$0xff]
      %v762 = vld [vmem:[%s559 + $0x328] sm:$0xff]
      %v763 = vld [vmem:[%s559 + $0x330] sm:$0xff]
      %v764 = vld [vmem:[%s559 + $0x338] sm:$0xff]
      %v765 = vld [vmem:[%s559 + $0x340] sm:$0xff]
      %v766 = vld [vmem:[%s559 + $0x348] sm:$0xff]
      %v767 = vld [vmem:[%s559 + $0x350] sm:$0xff]
      %v768 = vld [vmem:[%s559 + $0x358] sm:$0xff]
      %v769 = vld [vmem:[%s559 + $0x360] sm:$0xff]
      %v770 = vld [vmem:[%s559 + $0x368] sm:$0xff]
      %v771 = vld [vmem:[%s559 + $0x370] sm:$0xff]
      %v772 = vld [vmem:[%s559 + $0x378] sm:$0xff]
      %v773 = vld [vmem:[%s559 + $0x380] sm:$0xff]
      %v774 = vld [vmem:[%s559 + $0x388] sm:$0xff]
      %v775 = vld [vmem:[%s559 + $0x390] sm:$0xff]
      %v776 = vld [vmem:[%s559 + $0x398] sm:$0xff]
      %v777 = vld [vmem:[%s559 + $0x3a0] sm:$0xff]
      %v778 = vld [vmem:[%s559 + $0x3a8] sm:$0xff]
      %v779 = vld [vmem:[%s559 + $0x3b0] sm:$0xff]
      %v780 = vld [vmem:[%s559 + $0x3b8] sm:$0xff]
      %v781 = vld [vmem:[%s559 + $0x3c0] sm:$0xff]
      %v782 = vld [vmem:[%s559 + $0x3c8] sm:$0xff]
      %v783 = vld [vmem:[%s559 + $0x3d0] sm:$0xff]
      %v784 = vld [vmem:[%s559 + $0x3d8] sm:$0xff]
      %v785 = vld [vmem:[%s559 + $0x3e0] sm:$0xff]
      %v786 = vld [vmem:[%s559 + $0x3e8] sm:$0xff]
      %v787 = vld [vmem:[%s559 + $0x3f0] sm:$0xff]
      %v788 = vld [vmem:[%s559 + $0x3f8] sm:$0xff]
      %s789 = sshra.s32 %s525, 3
      %s790 = sand.u32 %s525, 7
      %s791 = sshra.s32 %s525, 3
      %s792 = sand.u32 %s525, 7
      %s793 = smul.u32 %s789, 4
      %s794 = smul.u32 %s793, 8
      %s795 = sadd.s32 %s794, %s792
      %s796 = scalar_lea.vmem [#allocation9], %s795
      %v797 = vld [vmem:[%s796] ss:$8 sm:$0xf]
      %v799 = vperm.slane %v797, 0
      %v800 = vperm.slane %v797, 1
      %v801 = vperm.slane %v797, 2
      %v802 = vperm.slane %v797, 3
      %v935 = vunpack.c.l.b16 %v661
      %v936 = vunpack.c.h.b16 %v661
      %v937 = vunpack.c.l.b16 %v662
      %v938 = vunpack.c.h.b16 %v662
      %v939 = vunpack.c.l.b16 %v663
      %v940 = vunpack.c.h.b16 %v663
      %v941 = vunpack.c.l.b16 %v664
      %v942 = vunpack.c.h.b16 %v664
      %v943 = vunpack.c.l.b16 %v665
      %v944 = vunpack.c.h.b16 %v665
      %v945 = vunpack.c.l.b16 %v666
      %v946 = vunpack.c.h.b16 %v666
      %v947 = vunpack.c.l.b16 %v667
      %v948 = vunpack.c.h.b16 %v667
      %v949 = vunpack.c.l.b16 %v668
      %v950 = vunpack.c.h.b16 %v668
      %v951 = vunpack.c.l.b16 %v669
      %v952 = vunpack.c.h.b16 %v669
      %v953 = vunpack.c.l.b16 %v670
      %v954 = vunpack.c.h.b16 %v670
      %v955 = vunpack.c.l.b16 %v671
      %v956 = vunpack.c.h.b16 %v671
      %v957 = vunpack.c.l.b16 %v672
      %v958 = vunpack.c.h.b16 %v672
      %v959 = vunpack.c.l.b16 %v673
      %v960 = vunpack.c.h.b16 %v673
      %v961 = vunpack.c.l.b16 %v674
      %v962 = vunpack.c.h.b16 %v674
      %v963 = vunpack.c.l.b16 %v675
      %v964 = vunpack.c.h.b16 %v675
      %v965 = vunpack.c.l.b16 %v676
      %v966 = vunpack.c.h.b16 %v676
      %v967 = vunpack.c.l.b16 %v677
      %v968 = vunpack.c.h.b16 %v677
      %v969 = vunpack.c.l.b16 %v678
      %v970 = vunpack.c.h.b16 %v678
      %v971 = vunpack.c.l.b16 %v679
      %v972 = vunpack.c.h.b16 %v679
      %v973 = vunpack.c.l.b16 %v680
      %v974 = vunpack.c.h.b16 %v680
      %v975 = vunpack.c.l.b16 %v681
      %v976 = vunpack.c.h.b16 %v681
      %v977 = vunpack.c.l.b16 %v682
      %v978 = vunpack.c.h.b16 %v682
      %v979 = vunpack.c.l.b16 %v683
      %v980 = vunpack.c.h.b16 %v683
      %v981 = vunpack.c.l.b16 %v684
      %v982 = vunpack.c.h.b16 %v684
      %v983 = vunpack.c.l.b16 %v685
      %v984 = vunpack.c.h.b16 %v685
      %v985 = vunpack.c.l.b16 %v686
      %v986 = vunpack.c.h.b16 %v686
      %v987 = vunpack.c.l.b16 %v687
      %v988 = vunpack.c.h.b16 %v687
      %v989 = vunpack.c.l.b16 %v688
      %v990 = vunpack.c.h.b16 %v688
      %v991 = vunpack.c.l.b16 %v689
      %v992 = vunpack.c.h.b16 %v689
      %v993 = vunpack.c.l.b16 %v690
      %v994 = vunpack.c.h.b16 %v690
      %v995 = vunpack.c.l.b16 %v691
      %v996 = vunpack.c.h.b16 %v691
      %v997 = vunpack.c.l.b16 %v692
      %v998 = vunpack.c.h.b16 %v692
      %v999 = vunpack.c.l.b16 %v693
      %v1000 = vunpack.c.h.b16 %v693
      %v1001 = vunpack.c.l.b16 %v694
      %v1002 = vunpack.c.h.b16 %v694
      %v1003 = vunpack.c.l.b16 %v695
      %v1004 = vunpack.c.h.b16 %v695
      %v1005 = vunpack.c.l.b16 %v696
      %v1006 = vunpack.c.h.b16 %v696
      %v1007 = vunpack.c.l.b16 %v697
      %v1008 = vunpack.c.h.b16 %v697
      %v1009 = vunpack.c.l.b16 %v698
      %v1010 = vunpack.c.h.b16 %v698
      %v1011 = vunpack.c.l.b16 %v699
      %v1012 = vunpack.c.h.b16 %v699
      %v1013 = vunpack.c.l.b16 %v700
      %v1014 = vunpack.c.h.b16 %v700
      %v1015 = vunpack.c.l.b16 %v701
      %v1016 = vunpack.c.h.b16 %v701
      %v1017 = vunpack.c.l.b16 %v702
      %v1018 = vunpack.c.h.b16 %v702
      %v1019 = vunpack.c.l.b16 %v703
      %v1020 = vunpack.c.h.b16 %v703
      %v1021 = vunpack.c.l.b16 %v704
      %v1022 = vunpack.c.h.b16 %v704
      %v1023 = vunpack.c.l.b16 %v705
      %v1024 = vunpack.c.h.b16 %v705
      %v1025 = vunpack.c.l.b16 %v706
      %v1026 = vunpack.c.h.b16 %v706
      %v1027 = vunpack.c.l.b16 %v707
      %v1028 = vunpack.c.h.b16 %v707
      %v1029 = vunpack.c.l.b16 %v708
      %v1030 = vunpack.c.h.b16 %v708
      %v1031 = vunpack.c.l.b16 %v709
      %v1032 = vunpack.c.h.b16 %v709
      %v1033 = vunpack.c.l.b16 %v710
      %v1034 = vunpack.c.h.b16 %v710
      %v1035 = vunpack.c.l.b16 %v711
      %v1036 = vunpack.c.h.b16 %v711
      %v1037 = vunpack.c.l.b16 %v712
      %v1038 = vunpack.c.h.b16 %v712
      %v1039 = vunpack.c.l.b16 %v713
      %v1040 = vunpack.c.h.b16 %v713
      %v1041 = vunpack.c.l.b16 %v714
      %v1042 = vunpack.c.h.b16 %v714
      %v1043 = vunpack.c.l.b16 %v715
      %v1044 = vunpack.c.h.b16 %v715
      %v1045 = vunpack.c.l.b16 %v716
      %v1046 = vunpack.c.h.b16 %v716
      %v1047 = vunpack.c.l.b16 %v717
      %v1048 = vunpack.c.h.b16 %v717
      %v1049 = vunpack.c.l.b16 %v718
      %v1050 = vunpack.c.h.b16 %v718
      %v1051 = vunpack.c.l.b16 %v719
      %v1052 = vunpack.c.h.b16 %v719
      %v1053 = vunpack.c.l.b16 %v720
      %v1054 = vunpack.c.h.b16 %v720
      %v1055 = vunpack.c.l.b16 %v721
      %v1056 = vunpack.c.h.b16 %v721
      %v1057 = vunpack.c.l.b16 %v722
      %v1058 = vunpack.c.h.b16 %v722
      %v1059 = vunpack.c.l.b16 %v723
      %v1060 = vunpack.c.h.b16 %v723
      %v1061 = vunpack.c.l.b16 %v724
      %v1062 = vunpack.c.h.b16 %v724
      %v1063 = vunpack.c.l.b16 %v725
      %v1064 = vunpack.c.h.b16 %v725
      %v1065 = vunpack.c.l.b16 %v726
      %v1066 = vunpack.c.h.b16 %v726
      %v1067 = vunpack.c.l.b16 %v727
      %v1068 = vunpack.c.h.b16 %v727
      %v1069 = vunpack.c.l.b16 %v728
      %v1070 = vunpack.c.h.b16 %v728
      %v1071 = vunpack.c.l.b16 %v729
      %v1072 = vunpack.c.h.b16 %v729
      %v1073 = vunpack.c.l.b16 %v730
      %v1074 = vunpack.c.h.b16 %v730
      %v1075 = vunpack.c.l.b16 %v731
      %v1076 = vunpack.c.h.b16 %v731
      %v1077 = vunpack.c.l.b16 %v732
      %v1078 = vunpack.c.h.b16 %v732
      %v1079 = vunpack.c.l.b16 %v733
      %v1080 = vunpack.c.h.b16 %v733
      %v1081 = vunpack.c.l.b16 %v734
      %v1082 = vunpack.c.h.b16 %v734
      %v1083 = vunpack.c.l.b16 %v735
      %v1084 = vunpack.c.h.b16 %v735
      %v1085 = vunpack.c.l.b16 %v736
      %v1086 = vunpack.c.h.b16 %v736
      %v1087 = vunpack.c.l.b16 %v737
      %v1088 = vunpack.c.h.b16 %v737
      %v1089 = vunpack.c.l.b16 %v738
      %v1090 = vunpack.c.h.b16 %v738
      %v1091 = vunpack.c.l.b16 %v739
      %v1092 = vunpack.c.h.b16 %v739
      %v1093 = vunpack.c.l.b16 %v740
      %v1094 = vunpack.c.h.b16 %v740
      %v1095 = vunpack.c.l.b16 %v741
      %v1096 = vunpack.c.h.b16 %v741
      %v1097 = vunpack.c.l.b16 %v742
      %v1098 = vunpack.c.h.b16 %v742
      %v1099 = vunpack.c.l.b16 %v743
      %v1100 = vunpack.c.h.b16 %v743
      %v1101 = vunpack.c.l.b16 %v744
      %v1102 = vunpack.c.h.b16 %v744
      %v1103 = vunpack.c.l.b16 %v745
      %v1104 = vunpack.c.h.b16 %v745
      %v1105 = vunpack.c.l.b16 %v746
      %v1106 = vunpack.c.h.b16 %v746
      %v1107 = vunpack.c.l.b16 %v747
      %v1108 = vunpack.c.h.b16 %v747
      %v1109 = vunpack.c.l.b16 %v748
      %v1110 = vunpack.c.h.b16 %v748
      %v1111 = vunpack.c.l.b16 %v749
      %v1112 = vunpack.c.h.b16 %v749
      %v1113 = vunpack.c.l.b16 %v750
      %v1114 = vunpack.c.h.b16 %v750
      %v1115 = vunpack.c.l.b16 %v751
      %v1116 = vunpack.c.h.b16 %v751
      %v1117 = vunpack.c.l.b16 %v752
      %v1118 = vunpack.c.h.b16 %v752
      %v1119 = vunpack.c.l.b16 %v753
      %v1120 = vunpack.c.h.b16 %v753
      %v1121 = vunpack.c.l.b16 %v754
      %v1122 = vunpack.c.h.b16 %v754
      %v1123 = vunpack.c.l.b16 %v755
      %v1124 = vunpack.c.h.b16 %v755
      %v1125 = vunpack.c.l.b16 %v756
      %v1126 = vunpack.c.h.b16 %v756
      %v1127 = vunpack.c.l.b16 %v757
      %v1128 = vunpack.c.h.b16 %v757
      %v1129 = vunpack.c.l.b16 %v758
      %v1130 = vunpack.c.h.b16 %v758
      %v1131 = vunpack.c.l.b16 %v759
      %v1132 = vunpack.c.h.b16 %v759
      %v1133 = vunpack.c.l.b16 %v760
      %v1134 = vunpack.c.h.b16 %v760
      %v1135 = vunpack.c.l.b16 %v761
      %v1136 = vunpack.c.h.b16 %v761
      %v1137 = vunpack.c.l.b16 %v762
      %v1138 = vunpack.c.h.b16 %v762
      %v1139 = vunpack.c.l.b16 %v763
      %v1140 = vunpack.c.h.b16 %v763
      %v1141 = vunpack.c.l.b16 %v764
      %v1142 = vunpack.c.h.b16 %v764
      %v1143 = vunpack.c.l.b16 %v765
      %v1144 = vunpack.c.h.b16 %v765
      %v1145 = vunpack.c.l.b16 %v766
      %v1146 = vunpack.c.h.b16 %v766
      %v1147 = vunpack.c.l.b16 %v767
      %v1148 = vunpack.c.h.b16 %v767
      %v1149 = vunpack.c.l.b16 %v768
      %v1150 = vunpack.c.h.b16 %v768
      %v1151 = vunpack.c.l.b16 %v769
      %v1152 = vunpack.c.h.b16 %v769
      %v1153 = vunpack.c.l.b16 %v770
      %v1154 = vunpack.c.h.b16 %v770
      %v1155 = vunpack.c.l.b16 %v771
      %v1156 = vunpack.c.h.b16 %v771
      %v1157 = vunpack.c.l.b16 %v772
      %v1158 = vunpack.c.h.b16 %v772
      %v1159 = vunpack.c.l.b16 %v773
      %v1160 = vunpack.c.h.b16 %v773
      %v1161 = vunpack.c.l.b16 %v774
      %v1162 = vunpack.c.h.b16 %v774
      %v1163 = vunpack.c.l.b16 %v775
      %v1164 = vunpack.c.h.b16 %v775
      %v1165 = vunpack.c.l.b16 %v776
      %v1166 = vunpack.c.h.b16 %v776
      %v1167 = vunpack.c.l.b16 %v777
      %v1168 = vunpack.c.h.b16 %v777
      %v1169 = vunpack.c.l.b16 %v778
      %v1170 = vunpack.c.h.b16 %v778
      %v1171 = vunpack.c.l.b16 %v779
      %v1172 = vunpack.c.h.b16 %v779
      %v1173 = vunpack.c.l.b16 %v780
      %v1174 = vunpack.c.h.b16 %v780
      %v1175 = vunpack.c.l.b16 %v781
      %v1176 = vunpack.c.h.b16 %v781
      %v1177 = vunpack.c.l.b16 %v782
      %v1178 = vunpack.c.h.b16 %v782
      %v1179 = vunpack.c.l.b16 %v783
      %v1180 = vunpack.c.h.b16 %v783
      %v1181 = vunpack.c.l.b16 %v784
      %v1182 = vunpack.c.h.b16 %v784
      %v1183 = vunpack.c.l.b16 %v785
      %v1184 = vunpack.c.h.b16 %v785
      %v1185 = vunpack.c.l.b16 %v786
      %v1186 = vunpack.c.h.b16 %v786
      %v1187 = vunpack.c.l.b16 %v787
      %v1188 = vunpack.c.h.b16 %v787
      %v1189 = vunpack.c.l.b16 %v788
      %v1190 = vunpack.c.h.b16 %v788
      %v1191 = vpack.c.b16 %v939, %v935
      %v1192 = vpack.c.b16 %v940, %v936
      %v1193 = vpack.c.b16 %v941, %v937
      %v1194 = vpack.c.b16 %v942, %v938
      %v1195 = vpack.c.b16 %v947, %v943
      %v1196 = vpack.c.b16 %v948, %v944
      %v1197 = vpack.c.b16 %v949, %v945
      %v1198 = vpack.c.b16 %v950, %v946
      %v1199 = vpack.c.b16 %v955, %v951
      %v1200 = vpack.c.b16 %v956, %v952
      %v1201 = vpack.c.b16 %v957, %v953
      %v1202 = vpack.c.b16 %v958, %v954
      %v1203 = vpack.c.b16 %v963, %v959
      %v1204 = vpack.c.b16 %v964, %v960
      %v1205 = vpack.c.b16 %v965, %v961
      %v1206 = vpack.c.b16 %v966, %v962
      %v1207 = vpack.c.b16 %v971, %v967
      %v1208 = vpack.c.b16 %v972, %v968
      %v1209 = vpack.c.b16 %v973, %v969
      %v1210 = vpack.c.b16 %v974, %v970
      %v1211 = vpack.c.b16 %v979, %v975
      %v1212 = vpack.c.b16 %v980, %v976
      %v1213 = vpack.c.b16 %v981, %v977
      %v1214 = vpack.c.b16 %v982, %v978
      %v1215 = vpack.c.b16 %v987, %v983
      %v1216 = vpack.c.b16 %v988, %v984
      %v1217 = vpack.c.b16 %v989, %v985
      %v1218 = vpack.c.b16 %v990, %v986
      %v1219 = vpack.c.b16 %v995, %v991
      %v1220 = vpack.c.b16 %v996, %v992
      %v1221 = vpack.c.b16 %v997, %v993
      %v1222 = vpack.c.b16 %v998, %v994
      %v1223 = vpack.c.b16 %v1003, %v999
      %v1224 = vpack.c.b16 %v1004, %v1000
      %v1225 = vpack.c.b16 %v1005, %v1001
      %v1226 = vpack.c.b16 %v1006, %v1002
      %v1227 = vpack.c.b16 %v1011, %v1007
      %v1228 = vpack.c.b16 %v1012, %v1008
      %v1229 = vpack.c.b16 %v1013, %v1009
      %v1230 = vpack.c.b16 %v1014, %v1010
      %v1231 = vpack.c.b16 %v1019, %v1015
      %v1232 = vpack.c.b16 %v1020, %v1016
      %v1233 = vpack.c.b16 %v1021, %v1017
      %v1234 = vpack.c.b16 %v1022, %v1018
      %v1235 = vpack.c.b16 %v1027, %v1023
      %v1236 = vpack.c.b16 %v1028, %v1024
      %v1237 = vpack.c.b16 %v1029, %v1025
      %v1238 = vpack.c.b16 %v1030, %v1026
      %v1239 = vpack.c.b16 %v1035, %v1031
      %v1240 = vpack.c.b16 %v1036, %v1032
      %v1241 = vpack.c.b16 %v1037, %v1033
      %v1242 = vpack.c.b16 %v1038, %v1034
      %v1243 = vpack.c.b16 %v1043, %v1039
      %v1244 = vpack.c.b16 %v1044, %v1040
      %v1245 = vpack.c.b16 %v1045, %v1041
      %v1246 = vpack.c.b16 %v1046, %v1042
      %v1247 = vpack.c.b16 %v1051, %v1047
      %v1248 = vpack.c.b16 %v1052, %v1048
      %v1249 = vpack.c.b16 %v1053, %v1049
      %v1250 = vpack.c.b16 %v1054, %v1050
      %v1251 = vpack.c.b16 %v1059, %v1055
      %v1252 = vpack.c.b16 %v1060, %v1056
      %v1253 = vpack.c.b16 %v1061, %v1057
      %v1254 = vpack.c.b16 %v1062, %v1058
      %v1255 = vpack.c.b16 %v1067, %v1063
      %v1256 = vpack.c.b16 %v1068, %v1064
      %v1257 = vpack.c.b16 %v1069, %v1065
      %v1258 = vpack.c.b16 %v1070, %v1066
      %v1259 = vpack.c.b16 %v1075, %v1071
      %v1260 = vpack.c.b16 %v1076, %v1072
      %v1261 = vpack.c.b16 %v1077, %v1073
      %v1262 = vpack.c.b16 %v1078, %v1074
      %v1263 = vpack.c.b16 %v1083, %v1079
      %v1264 = vpack.c.b16 %v1084, %v1080
      %v1265 = vpack.c.b16 %v1085, %v1081
      %v1266 = vpack.c.b16 %v1086, %v1082
      %v1267 = vpack.c.b16 %v1091, %v1087
      %v1268 = vpack.c.b16 %v1092, %v1088
      %v1269 = vpack.c.b16 %v1093, %v1089
      %v1270 = vpack.c.b16 %v1094, %v1090
      %v1271 = vpack.c.b16 %v1099, %v1095
      %v1272 = vpack.c.b16 %v1100, %v1096
      %v1273 = vpack.c.b16 %v1101, %v1097
      %v1274 = vpack.c.b16 %v1102, %v1098
      %v1275 = vpack.c.b16 %v1107, %v1103
      %v1276 = vpack.c.b16 %v1108, %v1104
      %v1277 = vpack.c.b16 %v1109, %v1105
      %v1278 = vpack.c.b16 %v1110, %v1106
      %v1279 = vpack.c.b16 %v1115, %v1111
      %v1280 = vpack.c.b16 %v1116, %v1112
      %v1281 = vpack.c.b16 %v1117, %v1113
      %v1282 = vpack.c.b16 %v1118, %v1114
      %v1283 = vpack.c.b16 %v1123, %v1119
      %v1284 = vpack.c.b16 %v1124, %v1120
      %v1285 = vpack.c.b16 %v1125, %v1121
      %v1286 = vpack.c.b16 %v1126, %v1122
      %v1287 = vpack.c.b16 %v1131, %v1127
      %v1288 = vpack.c.b16 %v1132, %v1128
      %v1289 = vpack.c.b16 %v1133, %v1129
      %v1290 = vpack.c.b16 %v1134, %v1130
      %v1291 = vpack.c.b16 %v1139, %v1135
      %v1292 = vpack.c.b16 %v1140, %v1136
      %v1293 = vpack.c.b16 %v1141, %v1137
      %v1294 = vpack.c.b16 %v1142, %v1138
      %v1295 = vpack.c.b16 %v1147, %v1143
      %v1296 = vpack.c.b16 %v1148, %v1144
      %v1297 = vpack.c.b16 %v1149, %v1145
      %v1298 = vpack.c.b16 %v1150, %v1146
      %v1299 = vpack.c.b16 %v1155, %v1151
      %v1300 = vpack.c.b16 %v1156, %v1152
      %v1301 = vpack.c.b16 %v1157, %v1153
      %v1302 = vpack.c.b16 %v1158, %v1154
      %v1303 = vpack.c.b16 %v1163, %v1159
      %v1304 = vpack.c.b16 %v1164, %v1160
      %v1305 = vpack.c.b16 %v1165, %v1161
      %v1306 = vpack.c.b16 %v1166, %v1162
      %v1307 = vpack.c.b16 %v1171, %v1167
      %v1308 = vpack.c.b16 %v1172, %v1168
      %v1309 = vpack.c.b16 %v1173, %v1169
      %v1310 = vpack.c.b16 %v1174, %v1170
      %v1311 = vpack.c.b16 %v1179, %v1175
      %v1312 = vpack.c.b16 %v1180, %v1176
      %v1313 = vpack.c.b16 %v1181, %v1177
      %v1314 = vpack.c.b16 %v1182, %v1178
      %v1315 = vpack.c.b16 %v1187, %v1183
      %v1316 = vpack.c.b16 %v1188, %v1184
      %v1317 = vpack.c.b16 %v1189, %v1185
      %v1318 = vpack.c.b16 %v1190, %v1186
      %1447 = vmatpush.bf16.msra.mxu0 %v1219
      %1448 = vmatpush.bf16.msra.mxu0 %v1215
      %1449 = vmatpush.bf16.msra.mxu0 %v1211
      %1450 = vmatpush.bf16.msra.mxu0 %v1207
      %1451 = vmatpush.bf16.msra.mxu0 %v1203
      %1452 = vmatpush.bf16.msra.mxu0 %v1199
      %1453 = vmatpush.bf16.msra.mxu0 %v1195
      %1454 = vmatpush.bf16.msra.mxu0 %v1191
      %1455 = vmatmul.bf16.gmra.mxu0 %v629
      %v1456 = vpop.f32.mrf.mxu0
      %v1457 = vadd.f32 %v799, %v1456
      %v1458 = vpop.f32.mrf.mxu0
      %v1459 = vadd.f32 %v799, %v1458
      %1460 = vmatmul.bf16.gmra.mxu0 %v633
      %v1461 = vpop.f32.mrf.mxu0
      %v1462 = vadd.f32 %v799, %v1461
      %v1463 = vpop.f32.mrf.mxu0
      %v1464 = vadd.f32 %v799, %v1463
      %1465 = vmatmul.bf16.gmra.mxu0 %v637
      %v1466 = vpop.f32.mrf.mxu0
      %v1467 = vadd.f32 %v799, %v1466
      %v1468 = vpop.f32.mrf.mxu0
      %v1469 = vadd.f32 %v799, %v1468
      %1470 = vmatmul.bf16.gmra.mxu0 %v641
      %v1471 = vpop.f32.mrf.mxu0
      %v1472 = vadd.f32 %v799, %v1471
      %v1473 = vpop.f32.mrf.mxu0
      %v1474 = vadd.f32 %v799, %v1473
      %1475 = vmatmul.bf16.gmra.mxu0 %v645
      %v1476 = vpop.f32.mrf.mxu0
      %v1477 = vadd.f32 %v799, %v1476
      %v1478 = vpop.f32.mrf.mxu0
      %v1479 = vadd.f32 %v799, %v1478
      %1480 = vmatmul.bf16.gmra.mxu0 %v649
      %v1481 = vpop.f32.mrf.mxu0
      %v1482 = vadd.f32 %v799, %v1481
      %v1483 = vpop.f32.mrf.mxu0
      %v1484 = vadd.f32 %v799, %v1483
      %1485 = vmatmul.bf16.gmra.mxu0 %v653
      %v1486 = vpop.f32.mrf.mxu0
      %v1487 = vadd.f32 %v799, %v1486
      %v1488 = vpop.f32.mrf.mxu0
      %v1489 = vadd.f32 %v799, %v1488
      %1490 = vmatmul.bf16.gmra.mxu0 %v657
      %v1491 = vpop.f32.mrf.mxu0
      %v1492 = vadd.f32 %v799, %v1491
      %v1493 = vpop.f32.mrf.mxu0
      %v1494 = vadd.f32 %v799, %v1493
      %1495 = vdwg.mxu0
      %1496 = vmatpush.bf16.msra.mxu0 %v1251
      %1497 = vmatpush.bf16.msra.mxu0 %v1247
      %1498 = vmatpush.bf16.msra.mxu0 %v1243
      %1499 = vmatpush.bf16.msra.mxu0 %v1239
      %1500 = vmatpush.bf16.msra.mxu0 %v1235
      %1501 = vmatpush.bf16.msra.mxu0 %v1231
      %1502 = vmatpush.bf16.msra.mxu0 %v1227
      %1503 = vmatpush.bf16.msra.mxu0 %v1223
      %1504 = vmatmul.bf16.gmra.mxu0 %v630
      %v1505 = vpop.f32.mrf.mxu0
      %v1506 = vadd.f32 %v1457, %v1505
      %v1507 = vpop.f32.mrf.mxu0
      %v1508 = vadd.f32 %v1459, %v1507
      %1509 = vmatmul.bf16.gmra.mxu0 %v634
      %v1510 = vpop.f32.mrf.mxu0
      %v1511 = vadd.f32 %v1462, %v1510
      %v1512 = vpop.f32.mrf.mxu0
      %v1513 = vadd.f32 %v1464, %v1512
      %1514 = vmatmul.bf16.gmra.mxu0 %v638
      %v1515 = vpop.f32.mrf.mxu0
      %v1516 = vadd.f32 %v1467, %v1515
      %v1517 = vpop.f32.mrf.mxu0
      %v1518 = vadd.f32 %v1469, %v1517
      %1519 = vmatmul.bf16.gmra.mxu0 %v642
      %v1520 = vpop.f32.mrf.mxu0
      %v1521 = vadd.f32 %v1472, %v1520
      %v1522 = vpop.f32.mrf.mxu0
      %v1523 = vadd.f32 %v1474, %v1522
      %1524 = vmatmul.bf16.gmra.mxu0 %v646
      %v1525 = vpop.f32.mrf.mxu0
      %v1526 = vadd.f32 %v1477, %v1525
      %v1527 = vpop.f32.mrf.mxu0
      %v1528 = vadd.f32 %v1479, %v1527
      %1529 = vmatmul.bf16.gmra.mxu0 %v650
      %v1530 = vpop.f32.mrf.mxu0
      %v1531 = vadd.f32 %v1482, %v1530
      %v1532 = vpop.f32.mrf.mxu0
      %v1533 = vadd.f32 %v1484, %v1532
      %1534 = vmatmul.bf16.gmra.mxu0 %v654
      %v1535 = vpop.f32.mrf.mxu0
      %v1536 = vadd.f32 %v1487, %v1535
      %v1537 = vpop.f32.mrf.mxu0
      %v1538 = vadd.f32 %v1489, %v1537
      %1539 = vmatmul.bf16.gmra.mxu0 %v658
      %v1540 = vpop.f32.mrf.mxu0
      %v1541 = vadd.f32 %v1492, %v1540
      %v1542 = vpop.f32.mrf.mxu0
      %v1543 = vadd.f32 %v1494, %v1542
      %1544 = vdwg.mxu0
      %1545 = vmatpush.bf16.msra.mxu0 %v1283
      %1546 = vmatpush.bf16.msra.mxu0 %v1279
      %1547 = vmatpush.bf16.msra.mxu0 %v1275
      %1548 = vmatpush.bf16.msra.mxu0 %v1271
      %1549 = vmatpush.bf16.msra.mxu0 %v1267
      %1550 = vmatpush.bf16.msra.mxu0 %v1263
      %1551 = vmatpush.bf16.msra.mxu0 %v1259
      %1552 = vmatpush.bf16.msra.mxu0 %v1255
      %1553 = vmatmul.bf16.gmra.mxu0 %v631
      %v1554 = vpop.f32.mrf.mxu0
      %v1555 = vadd.f32 %v1506, %v1554
      %v1556 = vpop.f32.mrf.mxu0
      %v1557 = vadd.f32 %v1508, %v1556
      %1558 = vmatmul.bf16.gmra.mxu0 %v635
      %v1559 = vpop.f32.mrf.mxu0
      %v1560 = vadd.f32 %v1511, %v1559
      %v1561 = vpop.f32.mrf.mxu0
      %v1562 = vadd.f32 %v1513, %v1561
      %1563 = vmatmul.bf16.gmra.mxu0 %v639
      %v1564 = vpop.f32.mrf.mxu0
      %v1565 = vadd.f32 %v1516, %v1564
      %v1566 = vpop.f32.mrf.mxu0
      %v1567 = vadd.f32 %v1518, %v1566
      %1568 = vmatmul.bf16.gmra.mxu0 %v643
      %v1569 = vpop.f32.mrf.mxu0
      %v1570 = vadd.f32 %v1521, %v1569
      %v1571 = vpop.f32.mrf.mxu0
      %v1572 = vadd.f32 %v1523, %v1571
      %1573 = vmatmul.bf16.gmra.mxu0 %v647
      %v1574 = vpop.f32.mrf.mxu0
      %v1575 = vadd.f32 %v1526, %v1574
      %v1576 = vpop.f32.mrf.mxu0
      %v1577 = vadd.f32 %v1528, %v1576
      %1578 = vmatmul.bf16.gmra.mxu0 %v651
      %v1579 = vpop.f32.mrf.mxu0
      %v1580 = vadd.f32 %v1531, %v1579
      %v1581 = vpop.f32.mrf.mxu0
      %v1582 = vadd.f32 %v1533, %v1581
      %1583 = vmatmul.bf16.gmra.mxu0 %v655
      %v1584 = vpop.f32.mrf.mxu0
      %v1585 = vadd.f32 %v1536, %v1584
      %v1586 = vpop.f32.mrf.mxu0
      %v1587 = vadd.f32 %v1538, %v1586
      %1588 = vmatmul.bf16.gmra.mxu0 %v659
      %v1589 = vpop.f32.mrf.mxu0
      %v1590 = vadd.f32 %v1541, %v1589
      %v1591 = vpop.f32.mrf.mxu0
      %v1592 = vadd.f32 %v1543, %v1591
      %1593 = vdwg.mxu0
      %1594 = vmatpush.bf16.msra.mxu0 %v1315
      %1595 = vmatpush.bf16.msra.mxu0 %v1311
      %1596 = vmatpush.bf16.msra.mxu0 %v1307
      %1597 = vmatpush.bf16.msra.mxu0 %v1303
      %1598 = vmatpush.bf16.msra.mxu0 %v1299
      %1599 = vmatpush.bf16.msra.mxu0 %v1295
      %1600 = vmatpush.bf16.msra.mxu0 %v1291
      %1601 = vmatpush.bf16.msra.mxu0 %v1287
      %1602 = vmatmul.bf16.gmra.mxu0 %v632
      %v1603 = vpop.f32.mrf.mxu0
      %v1604 = vadd.f32 %v1555, %v1603
      %v1605 = vpop.f32.mrf.mxu0
      %v1606 = vadd.f32 %v1557, %v1605
      %1607 = vmatmul.bf16.gmra.mxu0 %v636
      %v1608 = vpop.f32.mrf.mxu0
      %v1609 = vadd.f32 %v1560, %v1608
      %v1610 = vpop.f32.mrf.mxu0
      %v1611 = vadd.f32 %v1562, %v1610
      %1612 = vmatmul.bf16.gmra.mxu0 %v640
      %v1613 = vpop.f32.mrf.mxu0
      %v1614 = vadd.f32 %v1565, %v1613
      %v1615 = vpop.f32.mrf.mxu0
      %v1616 = vadd.f32 %v1567, %v1615
      %1617 = vmatmul.bf16.gmra.mxu0 %v644
      %v1618 = vpop.f32.mrf.mxu0
      %v1619 = vadd.f32 %v1570, %v1618
      %v1620 = vpop.f32.mrf.mxu0
      %v1621 = vadd.f32 %v1572, %v1620
      %1622 = vmatmul.bf16.gmra.mxu0 %v648
      %v1623 = vpop.f32.mrf.mxu0
      %v1624 = vadd.f32 %v1575, %v1623
      %v1625 = vpop.f32.mrf.mxu0
      %v1626 = vadd.f32 %v1577, %v1625
      %1627 = vmatmul.bf16.gmra.mxu0 %v652
      %v1628 = vpop.f32.mrf.mxu0
      %v1629 = vadd.f32 %v1580, %v1628
      %v1630 = vpop.f32.mrf.mxu0
      %v1631 = vadd.f32 %v1582, %v1630
      %1632 = vmatmul.bf16.gmra.mxu0 %v656
      %v1633 = vpop.f32.mrf.mxu0
      %v1634 = vadd.f32 %v1585, %v1633
      %v1635 = vpop.f32.mrf.mxu0
      %v1636 = vadd.f32 %v1587, %v1635
      %1637 = vmatmul.bf16.gmra.mxu0 %v660
      %v1638 = vpop.f32.mrf.mxu0
      %v1639 = vadd.f32 %v1590, %v1638
      %v1640 = vpop.f32.mrf.mxu0
      %v1641 = vadd.f32 %v1592, %v1640
      %1642 = vdwg.mxu0
      %1643 = vmatpush.bf16.msra.mxu0 %v1220
      %1644 = vmatpush.bf16.msra.mxu0 %v1216
      %1645 = vmatpush.bf16.msra.mxu0 %v1212
      %1646 = vmatpush.bf16.msra.mxu0 %v1208
      %1647 = vmatpush.bf16.msra.mxu0 %v1204
      %1648 = vmatpush.bf16.msra.mxu0 %v1200
      %1649 = vmatpush.bf16.msra.mxu0 %v1196
      %1650 = vmatpush.bf16.msra.mxu0 %v1192
      %1651 = vmatmul.bf16.gmra.mxu0 %v629
      %v1652 = vpop.f32.mrf.mxu0
      %v1653 = vadd.f32 %v800, %v1652
      %v1654 = vpop.f32.mrf.mxu0
      %v1655 = vadd.f32 %v800, %v1654
      %1656 = vmatmul.bf16.gmra.mxu0 %v633
      %v1657 = vpop.f32.mrf.mxu0
      %v1658 = vadd.f32 %v800, %v1657
      %v1659 = vpop.f32.mrf.mxu0
      %v1660 = vadd.f32 %v800, %v1659
      %1661 = vmatmul.bf16.gmra.mxu0 %v637
      %v1662 = vpop.f32.mrf.mxu0
      %v1663 = vadd.f32 %v800, %v1662
      %v1664 = vpop.f32.mrf.mxu0
      %v1665 = vadd.f32 %v800, %v1664
      %1666 = vmatmul.bf16.gmra.mxu0 %v641
      %v1667 = vpop.f32.mrf.mxu0
      %v1668 = vadd.f32 %v800, %v1667
      %v1669 = vpop.f32.mrf.mxu0
      %v1670 = vadd.f32 %v800, %v1669
      %1671 = vmatmul.bf16.gmra.mxu0 %v645
      %v1672 = vpop.f32.mrf.mxu0
      %v1673 = vadd.f32 %v800, %v1672
      %v1674 = vpop.f32.mrf.mxu0
      %v1675 = vadd.f32 %v800, %v1674
      %1676 = vmatmul.bf16.gmra.mxu0 %v649
      %v1677 = vpop.f32.mrf.mxu0
      %v1678 = vadd.f32 %v800, %v1677
      %v1679 = vpop.f32.mrf.mxu0
      %v1680 = vadd.f32 %v800, %v1679
      %1681 = vmatmul.bf16.gmra.mxu0 %v653
      %v1682 = vpop.f32.mrf.mxu0
      %v1683 = vadd.f32 %v800, %v1682
      %v1684 = vpop.f32.mrf.mxu0
      %v1685 = vadd.f32 %v800, %v1684
      %1686 = vmatmul.bf16.gmra.mxu0 %v657
      %v1687 = vpop.f32.mrf.mxu0
      %v1688 = vadd.f32 %v800, %v1687
      %v1689 = vpop.f32.mrf.mxu0
      %v1690 = vadd.f32 %v800, %v1689
      %1691 = vdwg.mxu0
      %1692 = vmatpush.bf16.msra.mxu0 %v1252
      %1693 = vmatpush.bf16.msra.mxu0 %v1248
      %1694 = vmatpush.bf16.msra.mxu0 %v1244
      %1695 = vmatpush.bf16.msra.mxu0 %v1240
      %1696 = vmatpush.bf16.msra.mxu0 %v1236
      %1697 = vmatpush.bf16.msra.mxu0 %v1232
      %1698 = vmatpush.bf16.msra.mxu0 %v1228
      %1699 = vmatpush.bf16.msra.mxu0 %v1224
      %1700 = vmatmul.bf16.gmra.mxu0 %v630
      %v1701 = vpop.f32.mrf.mxu0
      %v1702 = vadd.f32 %v1653, %v1701
      %v1703 = vpop.f32.mrf.mxu0
      %v1704 = vadd.f32 %v1655, %v1703
      %1705 = vmatmul.bf16.gmra.mxu0 %v634
      %v1706 = vpop.f32.mrf.mxu0
      %v1707 = vadd.f32 %v1658, %v1706
      %v1708 = vpop.f32.mrf.mxu0
      %v1709 = vadd.f32 %v1660, %v1708
      %1710 = vmatmul.bf16.gmra.mxu0 %v638
      %v1711 = vpop.f32.mrf.mxu0
      %v1712 = vadd.f32 %v1663, %v1711
      %v1713 = vpop.f32.mrf.mxu0
      %v1714 = vadd.f32 %v1665, %v1713
      %1715 = vmatmul.bf16.gmra.mxu0 %v642
      %v1716 = vpop.f32.mrf.mxu0
      %v1717 = vadd.f32 %v1668, %v1716
      %v1718 = vpop.f32.mrf.mxu0
      %v1719 = vadd.f32 %v1670, %v1718
      %1720 = vmatmul.bf16.gmra.mxu0 %v646
      %v1721 = vpop.f32.mrf.mxu0
      %v1722 = vadd.f32 %v1673, %v1721
      %v1723 = vpop.f32.mrf.mxu0
      %v1724 = vadd.f32 %v1675, %v1723
      %1725 = vmatmul.bf16.gmra.mxu0 %v650
      %v1726 = vpop.f32.mrf.mxu0
      %v1727 = vadd.f32 %v1678, %v1726
      %v1728 = vpop.f32.mrf.mxu0
      %v1729 = vadd.f32 %v1680, %v1728
      %1730 = vmatmul.bf16.gmra.mxu0 %v654
      %v1731 = vpop.f32.mrf.mxu0
      %v1732 = vadd.f32 %v1683, %v1731
      %v1733 = vpop.f32.mrf.mxu0
      %v1734 = vadd.f32 %v1685, %v1733
      %1735 = vmatmul.bf16.gmra.mxu0 %v658
      %v1736 = vpop.f32.mrf.mxu0
      %v1737 = vadd.f32 %v1688, %v1736
      %v1738 = vpop.f32.mrf.mxu0
      %v1739 = vadd.f32 %v1690, %v1738
      %1740 = vdwg.mxu0
      %1741 = vmatpush.bf16.msra.mxu0 %v1284
      %1742 = vmatpush.bf16.msra.mxu0 %v1280
      %1743 = vmatpush.bf16.msra.mxu0 %v1276
      %1744 = vmatpush.bf16.msra.mxu0 %v1272
      %1745 = vmatpush.bf16.msra.mxu0 %v1268
      %1746 = vmatpush.bf16.msra.mxu0 %v1264
      %1747 = vmatpush.bf16.msra.mxu0 %v1260
      %1748 = vmatpush.bf16.msra.mxu0 %v1256
      %1749 = vmatmul.bf16.gmra.mxu0 %v631
      %v1750 = vpop.f32.mrf.mxu0
      %v1751 = vadd.f32 %v1702, %v1750
      %v1752 = vpop.f32.mrf.mxu0
      %v1753 = vadd.f32 %v1704, %v1752
      %1754 = vmatmul.bf16.gmra.mxu0 %v635
      %v1755 = vpop.f32.mrf.mxu0
      %v1756 = vadd.f32 %v1707, %v1755
      %v1757 = vpop.f32.mrf.mxu0
      %v1758 = vadd.f32 %v1709, %v1757
      %1759 = vmatmul.bf16.gmra.mxu0 %v639
      %v1760 = vpop.f32.mrf.mxu0
      %v1761 = vadd.f32 %v1712, %v1760
      %v1762 = vpop.f32.mrf.mxu0
      %v1763 = vadd.f32 %v1714, %v1762
      %1764 = vmatmul.bf16.gmra.mxu0 %v643
      %v1765 = vpop.f32.mrf.mxu0
      %v1766 = vadd.f32 %v1717, %v1765
      %v1767 = vpop.f32.mrf.mxu0
      %v1768 = vadd.f32 %v1719, %v1767
      %1769 = vmatmul.bf16.gmra.mxu0 %v647
      %v1770 = vpop.f32.mrf.mxu0
      %v1771 = vadd.f32 %v1722, %v1770
      %v1772 = vpop.f32.mrf.mxu0
      %v1773 = vadd.f32 %v1724, %v1772
      %1774 = vmatmul.bf16.gmra.mxu0 %v651
      %v1775 = vpop.f32.mrf.mxu0
      %v1776 = vadd.f32 %v1727, %v1775
      %v1777 = vpop.f32.mrf.mxu0
      %v1778 = vadd.f32 %v1729, %v1777
      %1779 = vmatmul.bf16.gmra.mxu0 %v655
      %v1780 = vpop.f32.mrf.mxu0
      %v1781 = vadd.f32 %v1732, %v1780
      %v1782 = vpop.f32.mrf.mxu0
      %v1783 = vadd.f32 %v1734, %v1782
      %1784 = vmatmul.bf16.gmra.mxu0 %v659
      %v1785 = vpop.f32.mrf.mxu0
      %v1786 = vadd.f32 %v1737, %v1785
      %v1787 = vpop.f32.mrf.mxu0
      %v1788 = vadd.f32 %v1739, %v1787
      %1789 = vdwg.mxu0
      %1790 = vmatpush.bf16.msra.mxu0 %v1316
      %1791 = vmatpush.bf16.msra.mxu0 %v1312
      %1792 = vmatpush.bf16.msra.mxu0 %v1308
      %1793 = vmatpush.bf16.msra.mxu0 %v1304
      %1794 = vmatpush.bf16.msra.mxu0 %v1300
      %1795 = vmatpush.bf16.msra.mxu0 %v1296
      %1796 = vmatpush.bf16.msra.mxu0 %v1292
      %1797 = vmatpush.bf16.msra.mxu0 %v1288
      %1798 = vmatmul.bf16.gmra.mxu0 %v632
      %v1799 = vpop.f32.mrf.mxu0
      %v1800 = vadd.f32 %v1751, %v1799
      %v1801 = vpop.f32.mrf.mxu0
      %v1802 = vadd.f32 %v1753, %v1801
      %1803 = vmatmul.bf16.gmra.mxu0 %v636
      %v1804 = vpop.f32.mrf.mxu0
      %v1805 = vadd.f32 %v1756, %v1804
      %v1806 = vpop.f32.mrf.mxu0
      %v1807 = vadd.f32 %v1758, %v1806
      %1808 = vmatmul.bf16.gmra.mxu0 %v640
      %v1809 = vpop.f32.mrf.mxu0
      %v1810 = vadd.f32 %v1761, %v1809
      %v1811 = vpop.f32.mrf.mxu0
      %v1812 = vadd.f32 %v1763, %v1811
      %1813 = vmatmul.bf16.gmra.mxu0 %v644
      %v1814 = vpop.f32.mrf.mxu0
      %v1815 = vadd.f32 %v1766, %v1814
      %v1816 = vpop.f32.mrf.mxu0
      %v1817 = vadd.f32 %v1768, %v1816
      %1818 = vmatmul.bf16.gmra.mxu0 %v648
      %v1819 = vpop.f32.mrf.mxu0
      %v1820 = vadd.f32 %v1771, %v1819
      %v1821 = vpop.f32.mrf.mxu0
      %v1822 = vadd.f32 %v1773, %v1821
      %1823 = vmatmul.bf16.gmra.mxu0 %v652
      %v1824 = vpop.f32.mrf.mxu0
      %v1825 = vadd.f32 %v1776, %v1824
      %v1826 = vpop.f32.mrf.mxu0
      %v1827 = vadd.f32 %v1778, %v1826
      %1828 = vmatmul.bf16.gmra.mxu0 %v656
      %v1829 = vpop.f32.mrf.mxu0
      %v1830 = vadd.f32 %v1781, %v1829
      %v1831 = vpop.f32.mrf.mxu0
      %v1832 = vadd.f32 %v1783, %v1831
      %1833 = vmatmul.bf16.gmra.mxu0 %v660
      %v1834 = vpop.f32.mrf.mxu0
      %v1835 = vadd.f32 %v1786, %v1834
      %v1836 = vpop.f32.mrf.mxu0
      %v1837 = vadd.f32 %v1788, %v1836
      %1838 = vdwg.mxu0
      %1839 = vmatpush.bf16.msra.mxu0 %v1221
      %1840 = vmatpush.bf16.msra.mxu0 %v1217
      %1841 = vmatpush.bf16.msra.mxu0 %v1213
      %1842 = vmatpush.bf16.msra.mxu0 %v1209
      %1843 = vmatpush.bf16.msra.mxu0 %v1205
      %1844 = vmatpush.bf16.msra.mxu0 %v1201
      %1845 = vmatpush.bf16.msra.mxu0 %v1197
      %1846 = vmatpush.bf16.msra.mxu0 %v1193
      %1847 = vmatmul.bf16.gmra.mxu0 %v629
      %v1848 = vpop.f32.mrf.mxu0
      %v1849 = vadd.f32 %v801, %v1848
      %v1850 = vpop.f32.mrf.mxu0
      %v1851 = vadd.f32 %v801, %v1850
      %1852 = vmatmul.bf16.gmra.mxu0 %v633
      %v1853 = vpop.f32.mrf.mxu0
      %v1854 = vadd.f32 %v801, %v1853
      %v1855 = vpop.f32.mrf.mxu0
      %v1856 = vadd.f32 %v801, %v1855
      %1857 = vmatmul.bf16.gmra.mxu0 %v637
      %v1858 = vpop.f32.mrf.mxu0
      %v1859 = vadd.f32 %v801, %v1858
      %v1860 = vpop.f32.mrf.mxu0
      %v1861 = vadd.f32 %v801, %v1860
      %1862 = vmatmul.bf16.gmra.mxu0 %v641
      %v1863 = vpop.f32.mrf.mxu0
      %v1864 = vadd.f32 %v801, %v1863
      %v1865 = vpop.f32.mrf.mxu0
      %v1866 = vadd.f32 %v801, %v1865
      %1867 = vmatmul.bf16.gmra.mxu0 %v645
      %v1868 = vpop.f32.mrf.mxu0
      %v1869 = vadd.f32 %v801, %v1868
      %v1870 = vpop.f32.mrf.mxu0
      %v1871 = vadd.f32 %v801, %v1870
      %1872 = vmatmul.bf16.gmra.mxu0 %v649
      %v1873 = vpop.f32.mrf.mxu0
      %v1874 = vadd.f32 %v801, %v1873
      %v1875 = vpop.f32.mrf.mxu0
      %v1876 = vadd.f32 %v801, %v1875
      %1877 = vmatmul.bf16.gmra.mxu0 %v653
      %v1878 = vpop.f32.mrf.mxu0
      %v1879 = vadd.f32 %v801, %v1878
      %v1880 = vpop.f32.mrf.mxu0
      %v1881 = vadd.f32 %v801, %v1880
      %1882 = vmatmul.bf16.gmra.mxu0 %v657
      %v1883 = vpop.f32.mrf.mxu0
      %v1884 = vadd.f32 %v801, %v1883
      %v1885 = vpop.f32.mrf.mxu0
      %v1886 = vadd.f32 %v801, %v1885
      %1887 = vdwg.mxu0
      %1888 = vmatpush.bf16.msra.mxu0 %v1253
      %1889 = vmatpush.bf16.msra.mxu0 %v1249
      %1890 = vmatpush.bf16.msra.mxu0 %v1245
      %1891 = vmatpush.bf16.msra.mxu0 %v1241
      %1892 = vmatpush.bf16.msra.mxu0 %v1237
      %1893 = vmatpush.bf16.msra.mxu0 %v1233
      %1894 = vmatpush.bf16.msra.mxu0 %v1229
      %1895 = vmatpush.bf16.msra.mxu0 %v1225
      %1896 = vmatmul.bf16.gmra.mxu0 %v630
      %v1897 = vpop.f32.mrf.mxu0
      %v1898 = vadd.f32 %v1849, %v1897
      %v1899 = vpop.f32.mrf.mxu0
      %v1900 = vadd.f32 %v1851, %v1899
      %1901 = vmatmul.bf16.gmra.mxu0 %v634
      %v1902 = vpop.f32.mrf.mxu0
      %v1903 = vadd.f32 %v1854, %v1902
      %v1904 = vpop.f32.mrf.mxu0
      %v1905 = vadd.f32 %v1856, %v1904
      %1906 = vmatmul.bf16.gmra.mxu0 %v638
      %v1907 = vpop.f32.mrf.mxu0
      %v1908 = vadd.f32 %v1859, %v1907
      %v1909 = vpop.f32.mrf.mxu0
      %v1910 = vadd.f32 %v1861, %v1909
      %1911 = vmatmul.bf16.gmra.mxu0 %v642
      %v1912 = vpop.f32.mrf.mxu0
      %v1913 = vadd.f32 %v1864, %v1912
      %v1914 = vpop.f32.mrf.mxu0
      %v1915 = vadd.f32 %v1866, %v1914
      %1916 = vmatmul.bf16.gmra.mxu0 %v646
      %v1917 = vpop.f32.mrf.mxu0
      %v1918 = vadd.f32 %v1869, %v1917
      %v1919 = vpop.f32.mrf.mxu0
      %v1920 = vadd.f32 %v1871, %v1919
      %1921 = vmatmul.bf16.gmra.mxu0 %v650
      %v1922 = vpop.f32.mrf.mxu0
      %v1923 = vadd.f32 %v1874, %v1922
      %v1924 = vpop.f32.mrf.mxu0
      %v1925 = vadd.f32 %v1876, %v1924
      %1926 = vmatmul.bf16.gmra.mxu0 %v654
      %v1927 = vpop.f32.mrf.mxu0
      %v1928 = vadd.f32 %v1879, %v1927
      %v1929 = vpop.f32.mrf.mxu0
      %v1930 = vadd.f32 %v1881, %v1929
      %1931 = vmatmul.bf16.gmra.mxu0 %v658
      %v1932 = vpop.f32.mrf.mxu0
      %v1933 = vadd.f32 %v1884, %v1932
      %v1934 = vpop.f32.mrf.mxu0
      %v1935 = vadd.f32 %v1886, %v1934
      %1936 = vdwg.mxu0
      %1937 = vmatpush.bf16.msra.mxu0 %v1285
      %1938 = vmatpush.bf16.msra.mxu0 %v1281
      %1939 = vmatpush.bf16.msra.mxu0 %v1277
      %1940 = vmatpush.bf16.msra.mxu0 %v1273
      %1941 = vmatpush.bf16.msra.mxu0 %v1269
      %1942 = vmatpush.bf16.msra.mxu0 %v1265
      %1943 = vmatpush.bf16.msra.mxu0 %v1261
      %1944 = vmatpush.bf16.msra.mxu0 %v1257
      %1945 = vmatmul.bf16.gmra.mxu0 %v631
      %v1946 = vpop.f32.mrf.mxu0
      %v1947 = vadd.f32 %v1898, %v1946
      %v1948 = vpop.f32.mrf.mxu0
      %v1949 = vadd.f32 %v1900, %v1948
      %1950 = vmatmul.bf16.gmra.mxu0 %v635
      %v1951 = vpop.f32.mrf.mxu0
      %v1952 = vadd.f32 %v1903, %v1951
      %v1953 = vpop.f32.mrf.mxu0
      %v1954 = vadd.f32 %v1905, %v1953
      %1955 = vmatmul.bf16.gmra.mxu0 %v639
      %v1956 = vpop.f32.mrf.mxu0
      %v1957 = vadd.f32 %v1908, %v1956
      %v1958 = vpop.f32.mrf.mxu0
      %v1959 = vadd.f32 %v1910, %v1958
      %1960 = vmatmul.bf16.gmra.mxu0 %v643
      %v1961 = vpop.f32.mrf.mxu0
      %v1962 = vadd.f32 %v1913, %v1961
      %v1963 = vpop.f32.mrf.mxu0
      %v1964 = vadd.f32 %v1915, %v1963
      %1965 = vmatmul.bf16.gmra.mxu0 %v647
      %v1966 = vpop.f32.mrf.mxu0
      %v1967 = vadd.f32 %v1918, %v1966
      %v1968 = vpop.f32.mrf.mxu0
      %v1969 = vadd.f32 %v1920, %v1968
      %1970 = vmatmul.bf16.gmra.mxu0 %v651
      %v1971 = vpop.f32.mrf.mxu0
      %v1972 = vadd.f32 %v1923, %v1971
      %v1973 = vpop.f32.mrf.mxu0
      %v1974 = vadd.f32 %v1925, %v1973
      %1975 = vmatmul.bf16.gmra.mxu0 %v655
      %v1976 = vpop.f32.mrf.mxu0
      %v1977 = vadd.f32 %v1928, %v1976
      %v1978 = vpop.f32.mrf.mxu0
      %v1979 = vadd.f32 %v1930, %v1978
      %1980 = vmatmul.bf16.gmra.mxu0 %v659
      %v1981 = vpop.f32.mrf.mxu0
      %v1982 = vadd.f32 %v1933, %v1981
      %v1983 = vpop.f32.mrf.mxu0
      %v1984 = vadd.f32 %v1935, %v1983
      %1985 = vdwg.mxu0
      %1986 = vmatpush.bf16.msra.mxu0 %v1317
      %1987 = vmatpush.bf16.msra.mxu0 %v1313
      %1988 = vmatpush.bf16.msra.mxu0 %v1309
      %1989 = vmatpush.bf16.msra.mxu0 %v1305
      %1990 = vmatpush.bf16.msra.mxu0 %v1301
      %1991 = vmatpush.bf16.msra.mxu0 %v1297
      %1992 = vmatpush.bf16.msra.mxu0 %v1293
      %1993 = vmatpush.bf16.msra.mxu0 %v1289
      %1994 = vmatmul.bf16.gmra.mxu0 %v632
      %v1995 = vpop.f32.mrf.mxu0
      %v1996 = vadd.f32 %v1947, %v1995
      %v1997 = vpop.f32.mrf.mxu0
      %v1998 = vadd.f32 %v1949, %v1997
      %1999 = vmatmul.bf16.gmra.mxu0 %v636
      %v2000 = vpop.f32.mrf.mxu0
      %v2001 = vadd.f32 %v1952, %v2000
      %v2002 = vpop.f32.mrf.mxu0
      %v2003 = vadd.f32 %v1954, %v2002
      %2004 = vmatmul.bf16.gmra.mxu0 %v640
      %v2005 = vpop.f32.mrf.mxu0
      %v2006 = vadd.f32 %v1957, %v2005
      %v2007 = vpop.f32.mrf.mxu0
      %v2008 = vadd.f32 %v1959, %v2007
      %2009 = vmatmul.bf16.gmra.mxu0 %v644
      %v2010 = vpop.f32.mrf.mxu0
      %v2011 = vadd.f32 %v1962, %v2010
      %v2012 = vpop.f32.mrf.mxu0
      %v2013 = vadd.f32 %v1964, %v2012
      %2014 = vmatmul.bf16.gmra.mxu0 %v648
      %v2015 = vpop.f32.mrf.mxu0
      %v2016 = vadd.f32 %v1967, %v2015
      %v2017 = vpop.f32.mrf.mxu0
      %v2018 = vadd.f32 %v1969, %v2017
      %2019 = vmatmul.bf16.gmra.mxu0 %v652
      %v2020 = vpop.f32.mrf.mxu0
      %v2021 = vadd.f32 %v1972, %v2020
      %v2022 = vpop.f32.mrf.mxu0
      %v2023 = vadd.f32 %v1974, %v2022
      %2024 = vmatmul.bf16.gmra.mxu0 %v656
      %v2025 = vpop.f32.mrf.mxu0
      %v2026 = vadd.f32 %v1977, %v2025
      %v2027 = vpop.f32.mrf.mxu0
      %v2028 = vadd.f32 %v1979, %v2027
      %2029 = vmatmul.bf16.gmra.mxu0 %v660
      %v2030 = vpop.f32.mrf.mxu0
      %v2031 = vadd.f32 %v1982, %v2030
      %v2032 = vpop.f32.mrf.mxu0
      %v2033 = vadd.f32 %v1984, %v2032
      %2034 = vdwg.mxu0
      %2035 = vmatpush.bf16.msra.mxu0 %v1222
      %2036 = vmatpush.bf16.msra.mxu0 %v1218
      %2037 = vmatpush.bf16.msra.mxu0 %v1214
      %2038 = vmatpush.bf16.msra.mxu0 %v1210
      %2039 = vmatpush.bf16.msra.mxu0 %v1206
      %2040 = vmatpush.bf16.msra.mxu0 %v1202
      %2041 = vmatpush.bf16.msra.mxu0 %v1198
      %2042 = vmatpush.bf16.msra.mxu0 %v1194
      %2043 = vmatmul.bf16.gmra.mxu0 %v629
      %v2044 = vpop.f32.mrf.mxu0
      %v2045 = vadd.f32 %v802, %v2044
      %v2046 = vpop.f32.mrf.mxu0
      %v2047 = vadd.f32 %v802, %v2046
      %2048 = vmatmul.bf16.gmra.mxu0 %v633
      %v2049 = vpop.f32.mrf.mxu0
      %v2050 = vadd.f32 %v802, %v2049
      %v2051 = vpop.f32.mrf.mxu0
      %v2052 = vadd.f32 %v802, %v2051
      %2053 = vmatmul.bf16.gmra.mxu0 %v637
      %v2054 = vpop.f32.mrf.mxu0
      %v2055 = vadd.f32 %v802, %v2054
      %v2056 = vpop.f32.mrf.mxu0
      %v2057 = vadd.f32 %v802, %v2056
      %2058 = vmatmul.bf16.gmra.mxu0 %v641
      %v2059 = vpop.f32.mrf.mxu0
      %v2060 = vadd.f32 %v802, %v2059
      %v2061 = vpop.f32.mrf.mxu0
      %v2062 = vadd.f32 %v802, %v2061
      %2063 = vmatmul.bf16.gmra.mxu0 %v645
      %v2064 = vpop.f32.mrf.mxu0
      %v2065 = vadd.f32 %v802, %v2064
      %v2066 = vpop.f32.mrf.mxu0
      %v2067 = vadd.f32 %v802, %v2066
      %2068 = vmatmul.bf16.gmra.mxu0 %v649
      %v2069 = vpop.f32.mrf.mxu0
      %v2070 = vadd.f32 %v802, %v2069
      %v2071 = vpop.f32.mrf.mxu0
      %v2072 = vadd.f32 %v802, %v2071
      %2073 = vmatmul.bf16.gmra.mxu0 %v653
      %v2074 = vpop.f32.mrf.mxu0
      %v2075 = vadd.f32 %v802, %v2074
      %v2076 = vpop.f32.mrf.mxu0
      %v2077 = vadd.f32 %v802, %v2076
      %2078 = vmatmul.bf16.gmra.mxu0 %v657
      %v2079 = vpop.f32.mrf.mxu0
      %v2080 = vadd.f32 %v802, %v2079
      %v2081 = vpop.f32.mrf.mxu0
      %v2082 = vadd.f32 %v802, %v2081
      %2083 = vdwg.mxu0
      %2084 = vmatpush.bf16.msra.mxu0 %v1254
      %2085 = vmatpush.bf16.msra.mxu0 %v1250
      %2086 = vmatpush.bf16.msra.mxu0 %v1246
      %2087 = vmatpush.bf16.msra.mxu0 %v1242
      %2088 = vmatpush.bf16.msra.mxu0 %v1238
      %2089 = vmatpush.bf16.msra.mxu0 %v1234
      %2090 = vmatpush.bf16.msra.mxu0 %v1230
      %2091 = vmatpush.bf16.msra.mxu0 %v1226
      %2092 = vmatmul.bf16.gmra.mxu0 %v630
      %v2093 = vpop.f32.mrf.mxu0
      %v2094 = vadd.f32 %v2045, %v2093
      %v2095 = vpop.f32.mrf.mxu0
      %v2096 = vadd.f32 %v2047, %v2095
      %2097 = vmatmul.bf16.gmra.mxu0 %v634
      %v2098 = vpop.f32.mrf.mxu0
      %v2099 = vadd.f32 %v2050, %v2098
      %v2100 = vpop.f32.mrf.mxu0
      %v2101 = vadd.f32 %v2052, %v2100
      %2102 = vmatmul.bf16.gmra.mxu0 %v638
      %v2103 = vpop.f32.mrf.mxu0
      %v2104 = vadd.f32 %v2055, %v2103
      %v2105 = vpop.f32.mrf.mxu0
      %v2106 = vadd.f32 %v2057, %v2105
      %2107 = vmatmul.bf16.gmra.mxu0 %v642
      %v2108 = vpop.f32.mrf.mxu0
      %v2109 = vadd.f32 %v2060, %v2108
      %v2110 = vpop.f32.mrf.mxu0
      %v2111 = vadd.f32 %v2062, %v2110
      %2112 = vmatmul.bf16.gmra.mxu0 %v646
      %v2113 = vpop.f32.mrf.mxu0
      %v2114 = vadd.f32 %v2065, %v2113
      %v2115 = vpop.f32.mrf.mxu0
      %v2116 = vadd.f32 %v2067, %v2115
      %2117 = vmatmul.bf16.gmra.mxu0 %v650
      %v2118 = vpop.f32.mrf.mxu0
      %v2119 = vadd.f32 %v2070, %v2118
      %v2120 = vpop.f32.mrf.mxu0
      %v2121 = vadd.f32 %v2072, %v2120
      %2122 = vmatmul.bf16.gmra.mxu0 %v654
      %v2123 = vpop.f32.mrf.mxu0
      %v2124 = vadd.f32 %v2075, %v2123
      %v2125 = vpop.f32.mrf.mxu0
      %v2126 = vadd.f32 %v2077, %v2125
      %2127 = vmatmul.bf16.gmra.mxu0 %v658
      %v2128 = vpop.f32.mrf.mxu0
      %v2129 = vadd.f32 %v2080, %v2128
      %v2130 = vpop.f32.mrf.mxu0
      %v2131 = vadd.f32 %v2082, %v2130
      %2132 = vdwg.mxu0
      %2133 = vmatpush.bf16.msra.mxu0 %v1286
      %2134 = vmatpush.bf16.msra.mxu0 %v1282
      %2135 = vmatpush.bf16.msra.mxu0 %v1278
      %2136 = vmatpush.bf16.msra.mxu0 %v1274
      %2137 = vmatpush.bf16.msra.mxu0 %v1270
      %2138 = vmatpush.bf16.msra.mxu0 %v1266
      %2139 = vmatpush.bf16.msra.mxu0 %v1262
      %2140 = vmatpush.bf16.msra.mxu0 %v1258
      %2141 = vmatmul.bf16.gmra.mxu0 %v631
      %v2142 = vpop.f32.mrf.mxu0
      %v2143 = vadd.f32 %v2094, %v2142
      %v2144 = vpop.f32.mrf.mxu0
      %v2145 = vadd.f32 %v2096, %v2144
      %2146 = vmatmul.bf16.gmra.mxu0 %v635
      %v2147 = vpop.f32.mrf.mxu0
      %v2148 = vadd.f32 %v2099, %v2147
      %v2149 = vpop.f32.mrf.mxu0
      %v2150 = vadd.f32 %v2101, %v2149
      %2151 = vmatmul.bf16.gmra.mxu0 %v639
      %v2152 = vpop.f32.mrf.mxu0
      %v2153 = vadd.f32 %v2104, %v2152
      %v2154 = vpop.f32.mrf.mxu0
      %v2155 = vadd.f32 %v2106, %v2154
      %2156 = vmatmul.bf16.gmra.mxu0 %v643
      %v2157 = vpop.f32.mrf.mxu0
      %v2158 = vadd.f32 %v2109, %v2157
      %v2159 = vpop.f32.mrf.mxu0
      %v2160 = vadd.f32 %v2111, %v2159
      %2161 = vmatmul.bf16.gmra.mxu0 %v647
      %v2162 = vpop.f32.mrf.mxu0
      %v2163 = vadd.f32 %v2114, %v2162
      %v2164 = vpop.f32.mrf.mxu0
      %v2165 = vadd.f32 %v2116, %v2164
      %2166 = vmatmul.bf16.gmra.mxu0 %v651
      %v2167 = vpop.f32.mrf.mxu0
      %v2168 = vadd.f32 %v2119, %v2167
      %v2169 = vpop.f32.mrf.mxu0
      %v2170 = vadd.f32 %v2121, %v2169
      %2171 = vmatmul.bf16.gmra.mxu0 %v655
      %v2172 = vpop.f32.mrf.mxu0
      %v2173 = vadd.f32 %v2124, %v2172
      %v2174 = vpop.f32.mrf.mxu0
      %v2175 = vadd.f32 %v2126, %v2174
      %2176 = vmatmul.bf16.gmra.mxu0 %v659
      %v2177 = vpop.f32.mrf.mxu0
      %v2178 = vadd.f32 %v2129, %v2177
      %v2179 = vpop.f32.mrf.mxu0
      %v2180 = vadd.f32 %v2131, %v2179
      %2181 = vdwg.mxu0
      %2182 = vmatpush.bf16.msra.mxu0 %v1318
      %2183 = vmatpush.bf16.msra.mxu0 %v1314
      %2184 = vmatpush.bf16.msra.mxu0 %v1310
      %2185 = vmatpush.bf16.msra.mxu0 %v1306
      %2186 = vmatpush.bf16.msra.mxu0 %v1302
      %2187 = vmatpush.bf16.msra.mxu0 %v1298
      %2188 = vmatpush.bf16.msra.mxu0 %v1294
      %2189 = vmatpush.bf16.msra.mxu0 %v1290
      %2190 = vmatmul.bf16.gmra.mxu0 %v632
      %v2191 = vpop.f32.mrf.mxu0
      %v2192 = vadd.f32 %v2143, %v2191
      %v2193 = vpop.f32.mrf.mxu0
      %v2194 = vadd.f32 %v2145, %v2193
      %2195 = vmatmul.bf16.gmra.mxu0 %v636
      %v2196 = vpop.f32.mrf.mxu0
      %v2197 = vadd.f32 %v2148, %v2196
      %v2198 = vpop.f32.mrf.mxu0
      %v2199 = vadd.f32 %v2150, %v2198
      %2200 = vmatmul.bf16.gmra.mxu0 %v640
      %v2201 = vpop.f32.mrf.mxu0
      %v2202 = vadd.f32 %v2153, %v2201
      %v2203 = vpop.f32.mrf.mxu0
      %v2204 = vadd.f32 %v2155, %v2203
      %2205 = vmatmul.bf16.gmra.mxu0 %v644
      %v2206 = vpop.f32.mrf.mxu0
      %v2207 = vadd.f32 %v2158, %v2206
      %v2208 = vpop.f32.mrf.mxu0
      %v2209 = vadd.f32 %v2160, %v2208
      %2210 = vmatmul.bf16.gmra.mxu0 %v648
      %v2211 = vpop.f32.mrf.mxu0
      %v2212 = vadd.f32 %v2163, %v2211
      %v2213 = vpop.f32.mrf.mxu0
      %v2214 = vadd.f32 %v2165, %v2213
      %2215 = vmatmul.bf16.gmra.mxu0 %v652
      %v2216 = vpop.f32.mrf.mxu0
      %v2217 = vadd.f32 %v2168, %v2216
      %v2218 = vpop.f32.mrf.mxu0
      %v2219 = vadd.f32 %v2170, %v2218
      %2220 = vmatmul.bf16.gmra.mxu0 %v656
      %v2221 = vpop.f32.mrf.mxu0
      %v2222 = vadd.f32 %v2173, %v2221
      %v2223 = vpop.f32.mrf.mxu0
      %v2224 = vadd.f32 %v2175, %v2223
      %2225 = vmatmul.bf16.gmra.mxu0 %v660
      %v2226 = vpop.f32.mrf.mxu0
      %v2227 = vadd.f32 %v2178, %v2226
      %v2228 = vpop.f32.mrf.mxu0
      %v2229 = vadd.f32 %v2180, %v2228
      %2230 = vdwg.mxu0
      %2231 = vst [vmem:[#allocation2] sm:$0xff] %v1604
      %2232 = vst [vmem:[#allocation2 + $0x8] sm:$0xff] %v1800
      %2233 = vst [vmem:[#allocation2 + $0x10] sm:$0xff] %v1996
      %2234 = vst [vmem:[#allocation2 + $0x18] sm:$0xff] %v2192
      %2235 = vst [vmem:[#allocation2 + $0x20] sm:$0xff] %v1606
      %2236 = vst [vmem:[#allocation2 + $0x28] sm:$0xff] %v1802
      %2237 = vst [vmem:[#allocation2 + $0x30] sm:$0xff] %v1998
      %2238 = vst [vmem:[#allocation2 + $0x38] sm:$0xff] %v2194
      %2239 = vst [vmem:[#allocation2 + $0x40] sm:$0xff] %v1609
      %2240 = vst [vmem:[#allocation2 + $0x48] sm:$0xff] %v1805
      %2241 = vst [vmem:[#allocation2 + $0x50] sm:$0xff] %v2001
      %2242 = vst [vmem:[#allocation2 + $0x58] sm:$0xff] %v2197
      %2243 = vst [vmem:[#allocation2 + $0x60] sm:$0xff] %v1611
      %2244 = vst [vmem:[#allocation2 + $0x68] sm:$0xff] %v1807
      %2245 = vst [vmem:[#allocation2 + $0x70] sm:$0xff] %v2003
      %2246 = vst [vmem:[#allocation2 + $0x78] sm:$0xff] %v2199
      %2247 = vst [vmem:[#allocation2 + $0x80] sm:$0xff] %v1614
      %2248 = vst [vmem:[#allocation2 + $0x88] sm:$0xff] %v1810
      %2249 = vst [vmem:[#allocation2 + $0x90] sm:$0xff] %v2006
      %2250 = vst [vmem:[#allocation2 + $0x98] sm:$0xff] %v2202
      %2251 = vst [vmem:[#allocation2 + $0xa0] sm:$0xff] %v1616
      %2252 = vst [vmem:[#allocation2 + $0xa8] sm:$0xff] %v1812
      %2253 = vst [vmem:[#allocation2 + $0xb0] sm:$0xff] %v2008
      %2254 = vst [vmem:[#allocation2 + $0xb8] sm:$0xff] %v2204
      %2255 = vst [vmem:[#allocation2 + $0xc0] sm:$0xff] %v1619
      %2256 = vst [vmem:[#allocation2 + $0xc8] sm:$0xff] %v1815
      %2257 = vst [vmem:[#allocation2 + $0xd0] sm:$0xff] %v2011
      %2258 = vst [vmem:[#allocation2 + $0xd8] sm:$0xff] %v2207
      %2259 = vst [vmem:[#allocation2 + $0xe0] sm:$0xff] %v1621
      %2260 = vst [vmem:[#allocation2 + $0xe8] sm:$0xff] %v1817
      %2261 = vst [vmem:[#allocation2 + $0xf0] sm:$0xff] %v2013
      %2262 = vst [vmem:[#allocation2 + $0xf8] sm:$0xff] %v2209
      %2263 = vst [vmem:[#allocation2 + $0x100] sm:$0xff] %v1624
      %2264 = vst [vmem:[#allocation2 + $0x108] sm:$0xff] %v1820
      %2265 = vst [vmem:[#allocation2 + $0x110] sm:$0xff] %v2016
      %2266 = vst [vmem:[#allocation2 + $0x118] sm:$0xff] %v2212
      %2267 = vst [vmem:[#allocation2 + $0x120] sm:$0xff] %v1626
      %2268 = vst [vmem:[#allocation2 + $0x128] sm:$0xff] %v1822
      %2269 = vst [vmem:[#allocation2 + $0x130] sm:$0xff] %v2018
      %2270 = vst [vmem:[#allocation2 + $0x138] sm:$0xff] %v2214
      %2271 = vst [vmem:[#allocation2 + $0x140] sm:$0xff] %v1629
      %2272 = vst [vmem:[#allocation2 + $0x148] sm:$0xff] %v1825
      %2273 = vst [vmem:[#allocation2 + $0x150] sm:$0xff] %v2021
      %2274 = vst [vmem:[#allocation2 + $0x158] sm:$0xff] %v2217
      %2275 = vst [vmem:[#allocation2 + $0x160] sm:$0xff] %v1631
      %2276 = vst [vmem:[#allocation2 + $0x168] sm:$0xff] %v1827
      %2277 = vst [vmem:[#allocation2 + $0x170] sm:$0xff] %v2023
      %2278 = vst [vmem:[#allocation2 + $0x178] sm:$0xff] %v2219
      %2279 = vst [vmem:[#allocation2 + $0x180] sm:$0xff] %v1634
      %2280 = vst [vmem:[#allocation2 + $0x188] sm:$0xff] %v1830
      %2281 = vst [vmem:[#allocation2 + $0x190] sm:$0xff] %v2026
      %2282 = vst [vmem:[#allocation2 + $0x198] sm:$0xff] %v2222
      %2283 = vst [vmem:[#allocation2 + $0x1a0] sm:$0xff] %v1636
      %2284 = vst [vmem:[#allocation2 + $0x1a8] sm:$0xff] %v1832
      %2285 = vst [vmem:[#allocation2 + $0x1b0] sm:$0xff] %v2028
      %2286 = vst [vmem:[#allocation2 + $0x1b8] sm:$0xff] %v2224
      %2287 = vst [vmem:[#allocation2 + $0x1c0] sm:$0xff] %v1639
      %2288 = vst [vmem:[#allocation2 + $0x1c8] sm:$0xff] %v1835
      %2289 = vst [vmem:[#allocation2 + $0x1d0] sm:$0xff] %v2031
      %2290 = vst [vmem:[#allocation2 + $0x1d8] sm:$0xff] %v2227
      %2291 = vst [vmem:[#allocation2 + $0x1e0] sm:$0xff] %v1641
      %2292 = vst [vmem:[#allocation2 + $0x1e8] sm:$0xff] %v1837
      %2293 = vst [vmem:[#allocation2 + $0x1f0] sm:$0xff] %v2033
      %2294 = vst [vmem:[#allocation2 + $0x1f8] sm:$0xff] %v2229
    $region54: #{_lambda_.2} parent=1 // loop_footer
      %s529 = sadd.s32 1, %s525
    $region55: #{_lambda_.2} parent=1 // loop_footer_branch
      %524 = sbr.rel target = $region51
    $region56: #{_lambda_.2} parent=1 // loop_exit
      _
    %v2295 = vld [vmem:[#allocation2] sm:$0xff]
    %v2296 = vld [vmem:[#allocation2 + $0x8] sm:$0xff]
    %v2297 = vld [vmem:[#allocation2 + $0x10] sm:$0xff]
    %v2298 = vld [vmem:[#allocation2 + $0x18] sm:$0xff]
    %v2299 = vld [vmem:[#allocation2 + $0x20] sm:$0xff]
    %v2300 = vld [vmem:[#allocation2 + $0x28] sm:$0xff]
    %v2301 = vld [vmem:[#allocation2 + $0x30] sm:$0xff]
    %v2302 = vld [vmem:[#allocation2 + $0x38] sm:$0xff]
    %v2303 = vld [vmem:[#allocation2 + $0x40] sm:$0xff]
    %v2304 = vld [vmem:[#allocation2 + $0x48] sm:$0xff]
    %v2305 = vld [vmem:[#allocation2 + $0x50] sm:$0xff]
    %v2306 = vld [vmem:[#allocation2 + $0x58] sm:$0xff]
    %v2307 = vld [vmem:[#allocation2 + $0x60] sm:$0xff]
    %v2308 = vld [vmem:[#allocation2 + $0x68] sm:$0xff]
    %v2309 = vld [vmem:[#allocation2 + $0x70] sm:$0xff]
    %v2310 = vld [vmem:[#allocation2 + $0x78] sm:$0xff]
    %v2311 = vld [vmem:[#allocation2 + $0x80] sm:$0xff]
    %v2312 = vld [vmem:[#allocation2 + $0x88] sm:$0xff]
    %v2313 = vld [vmem:[#allocation2 + $0x90] sm:$0xff]
    %v2314 = vld [vmem:[#allocation2 + $0x98] sm:$0xff]
    %v2315 = vld [vmem:[#allocation2 + $0xa0] sm:$0xff]
    %v2316 = vld [vmem:[#allocation2 + $0xa8] sm:$0xff]
    %v2317 = vld [vmem:[#allocation2 + $0xb0] sm:$0xff]
    %v2318 = vld [vmem:[#allocation2 + $0xb8] sm:$0xff]
    %v2319 = vld [vmem:[#allocation2 + $0xc0] sm:$0xff]
    %v2320 = vld [vmem:[#allocation2 + $0xc8] sm:$0xff]
    %v2321 = vld [vmem:[#allocation2 + $0xd0] sm:$0xff]
    %v2322 = vld [vmem:[#allocation2 + $0xd8] sm:$0xff]
    %v2323 = vld [vmem:[#allocation2 + $0xe0] sm:$0xff]
    %v2324 = vld [vmem:[#allocation2 + $0xe8] sm:$0xff]
    %v2325 = vld [vmem:[#allocation2 + $0xf0] sm:$0xff]
    %v2326 = vld [vmem:[#allocation2 + $0xf8] sm:$0xff]
    %v2327 = vld [vmem:[#allocation2 + $0x100] sm:$0xff]
    %v2328 = vld [vmem:[#allocation2 + $0x108] sm:$0xff]
    %v2329 = vld [vmem:[#allocation2 + $0x110] sm:$0xff]
    %v2330 = vld [vmem:[#allocation2 + $0x118] sm:$0xff]
    %v2331 = vld [vmem:[#allocation2 + $0x120] sm:$0xff]
    %v2332 = vld [vmem:[#allocation2 + $0x128] sm:$0xff]
    %v2333 = vld [vmem:[#allocation2 + $0x130] sm:$0xff]
    %v2334 = vld [vmem:[#allocation2 + $0x138] sm:$0xff]
    %v2335 = vld [vmem:[#allocation2 + $0x140] sm:$0xff]
    %v2336 = vld [vmem:[#allocation2 + $0x148] sm:$0xff]
    %v2337 = vld [vmem:[#allocation2 + $0x150] sm:$0xff]
    %v2338 = vld [vmem:[#allocation2 + $0x158] sm:$0xff]
    %v2339 = vld [vmem:[#allocation2 + $0x160] sm:$0xff]
    %v2340 = vld [vmem:[#allocation2 + $0x168] sm:$0xff]
    %v2341 = vld [vmem:[#allocation2 + $0x170] sm:$0xff]
    %v2342 = vld [vmem:[#allocation2 + $0x178] sm:$0xff]
    %v2343 = vld [vmem:[#allocation2 + $0x180] sm:$0xff]
    %v2344 = vld [vmem:[#allocation2 + $0x188] sm:$0xff]
    %v2345 = vld [vmem:[#allocation2 + $0x190] sm:$0xff]
    %v2346 = vld [vmem:[#allocation2 + $0x198] sm:$0xff]
    %v2347 = vld [vmem:[#allocation2 + $0x1a0] sm:$0xff]
    %v2348 = vld [vmem:[#allocation2 + $0x1a8] sm:$0xff]
    %v2349 = vld [vmem:[#allocation2 + $0x1b0] sm:$0xff]
    %v2350 = vld [vmem:[#allocation2 + $0x1b8] sm:$0xff]
    %v2351 = vld [vmem:[#allocation2 + $0x1c0] sm:$0xff]
    %v2352 = vld [vmem:[#allocation2 + $0x1c8] sm:$0xff]
    %v2353 = vld [vmem:[#allocation2 + $0x1d0] sm:$0xff]
    %v2354 = vld [vmem:[#allocation2 + $0x1d8] sm:$0xff]
    %v2355 = vld [vmem:[#allocation2 + $0x1e0] sm:$0xff]
    %v2356 = vld [vmem:[#allocation2 + $0x1e8] sm:$0xff]
    %v2357 = vld [vmem:[#allocation2 + $0x1f0] sm:$0xff]
    %v2358 = vld [vmem:[#allocation2 + $0x1f8] sm:$0xff]
    %v2359 = vld [vmem:[#allocation10] sm:$0xff]
    %v2360 = vld [vmem:[#allocation10 + $0x8] sm:$0xff]
    %v2361 = vld [vmem:[#allocation10 + $0x10] sm:$0xff]
    %v2362 = vld [vmem:[#allocation10 + $0x18] sm:$0xff]
    %v2363 = vld [vmem:[#allocation10 + $0x20] sm:$0xff]
    %v2364 = vld [vmem:[#allocation10 + $0x28] sm:$0xff]
    %v2365 = vld [vmem:[#allocation10 + $0x30] sm:$0xff]
    %v2366 = vld [vmem:[#allocation10 + $0x38] sm:$0xff]
    %v2367 = vld [vmem:[#allocation10 + $0x40] sm:$0xff]
    %v2368 = vld [vmem:[#allocation10 + $0x48] sm:$0xff]
    %v2369 = vld [vmem:[#allocation10 + $0x50] sm:$0xff]
    %v2370 = vld [vmem:[#allocation10 + $0x58] sm:$0xff]
    %v2371 = vld [vmem:[#allocation10 + $0x60] sm:$0xff]
    %v2372 = vld [vmem:[#allocation10 + $0x68] sm:$0xff]
    %v2373 = vld [vmem:[#allocation10 + $0x70] sm:$0xff]
    %v2374 = vld [vmem:[#allocation10 + $0x78] sm:$0xff]
    %v2375 = vld [vmem:[#allocation10 + $0x80] sm:$0xff]
    %v2376 = vld [vmem:[#allocation10 + $0x88] sm:$0xff]
    %v2377 = vld [vmem:[#allocation10 + $0x90] sm:$0xff]
    %v2378 = vld [vmem:[#allocation10 + $0x98] sm:$0xff]
    %v2379 = vld [vmem:[#allocation10 + $0xa0] sm:$0xff]
    %v2380 = vld [vmem:[#allocation10 + $0xa8] sm:$0xff]
    %v2381 = vld [vmem:[#allocation10 + $0xb0] sm:$0xff]
    %v2382 = vld [vmem:[#allocation10 + $0xb8] sm:$0xff]
    %v2383 = vld [vmem:[#allocation10 + $0xc0] sm:$0xff]
    %v2384 = vld [vmem:[#allocation10 + $0xc8] sm:$0xff]
    %v2385 = vld [vmem:[#allocation10 + $0xd0] sm:$0xff]
    %v2386 = vld [vmem:[#allocation10 + $0xd8] sm:$0xff]
    %v2387 = vld [vmem:[#allocation10 + $0xe0] sm:$0xff]
    %v2388 = vld [vmem:[#allocation10 + $0xe8] sm:$0xff]
    %v2389 = vld [vmem:[#allocation10 + $0xf0] sm:$0xff]
    %v2390 = vld [vmem:[#allocation10 + $0xf8] sm:$0xff]
    %v2391 = vld [vmem:[#allocation10 + $0x100] sm:$0xff]
    %v2392 = vld [vmem:[#allocation10 + $0x108] sm:$0xff]
    %v2393 = vld [vmem:[#allocation10 + $0x110] sm:$0xff]
    %v2394 = vld [vmem:[#allocation10 + $0x118] sm:$0xff]
    %v2395 = vld [vmem:[#allocation10 + $0x120] sm:$0xff]
    %v2396 = vld [vmem:[#allocation10 + $0x128] sm:$0xff]
    %v2397 = vld [vmem:[#allocation10 + $0x130] sm:$0xff]
    %v2398 = vld [vmem:[#allocation10 + $0x138] sm:$0xff]
    %v2399 = vld [vmem:[#allocation10 + $0x140] sm:$0xff]
    %v2400 = vld [vmem:[#allocation10 + $0x148] sm:$0xff]
    %v2401 = vld [vmem:[#allocation10 + $0x150] sm:$0xff]
    %v2402 = vld [vmem:[#allocation10 + $0x158] sm:$0xff]
    %v2403 = vld [vmem:[#allocation10 + $0x160] sm:$0xff]
    %v2404 = vld [vmem:[#allocation10 + $0x168] sm:$0xff]
    %v2405 = vld [vmem:[#allocation10 + $0x170] sm:$0xff]
    %v2406 = vld [vmem:[#allocation10 + $0x178] sm:$0xff]
    %v2407 = vld [vmem:[#allocation10 + $0x180] sm:$0xff]
    %v2408 = vld [vmem:[#allocation10 + $0x188] sm:$0xff]
    %v2409 = vld [vmem:[#allocation10 + $0x190] sm:$0xff]
    %v2410 = vld [vmem:[#allocation10 + $0x198] sm:$0xff]
    %v2411 = vld [vmem:[#allocation10 + $0x1a0] sm:$0xff]
    %v2412 = vld [vmem:[#allocation10 + $0x1a8] sm:$0xff]
    %v2413 = vld [vmem:[#allocation10 + $0x1b0] sm:$0xff]
    %v2414 = vld [vmem:[#allocation10 + $0x1b8] sm:$0xff]
    %v2415 = vld [vmem:[#allocation10 + $0x1c0] sm:$0xff]
    %v2416 = vld [vmem:[#allocation10 + $0x1c8] sm:$0xff]
    %v2417 = vld [vmem:[#allocation10 + $0x1d0] sm:$0xff]
    %v2418 = vld [vmem:[#allocation10 + $0x1d8] sm:$0xff]
    %v2419 = vld [vmem:[#allocation10 + $0x1e0] sm:$0xff]
    %v2420 = vld [vmem:[#allocation10 + $0x1e8] sm:$0xff]
    %v2421 = vld [vmem:[#allocation10 + $0x1f0] sm:$0xff]
    %v2422 = vld [vmem:[#allocation10 + $0x1f8] sm:$0xff]
    %v2423 = vld [vmem:[#allocation12] sm:$0x1]
    %v2425 = vperm.slane %v2423, 0
    %2427 = vmatpush.msra.mxu0 %v2374
    %2428 = vmatpush.msra.mxu0 %v2373
    %2429 = vmatpush.msra.mxu0 %v2372
    %2430 = vmatpush.msra.mxu0 %v2371
    %2431 = vmatpush.msra.mxu0 %v2370
    %2432 = vmatpush.msra.mxu0 %v2369
    %2433 = vmatpush.msra.mxu0 %v2368
    %2434 = vmatpush.msra.mxu0 %v2367
    %2435 = vmatpush.msra.mxu0 %v2366
    %2436 = vmatpush.msra.mxu0 %v2365
    %2437 = vmatpush.msra.mxu0 %v2364
    %2438 = vmatpush.msra.mxu0 %v2363
    %2439 = vmatpush.msra.mxu0 %v2362
    %2440 = vmatpush.msra.mxu0 %v2361
    %2441 = vmatpush.msra.mxu0 %v2360
    %2442 = vmatpush.msra.mxu0 %v2359
    %2443 = vmatmul.f32.gmra.mxu0 %v2295
    %v2444 = vpop.f32.mrf.mxu0
    %v2445 = vadd.f32 %v2425, %v2444
    %2446 = vmatmul.f32.gmra.mxu0 %v2299
    %v2447 = vpop.f32.mrf.mxu0
    %v2448 = vadd.f32 %v2425, %v2447
    %2449 = vmatmul.f32.gmra.mxu0 %v2303
    %v2450 = vpop.f32.mrf.mxu0
    %v2451 = vadd.f32 %v2425, %v2450
    %2452 = vmatmul.f32.gmra.mxu0 %v2307
    %v2453 = vpop.f32.mrf.mxu0
    %v2454 = vadd.f32 %v2425, %v2453
    %2455 = vmatmul.f32.gmra.mxu0 %v2311
    %v2456 = vpop.f32.mrf.mxu0
    %v2457 = vadd.f32 %v2425, %v2456
    %2458 = vmatmul.f32.gmra.mxu0 %v2315
    %v2459 = vpop.f32.mrf.mxu0
    %v2460 = vadd.f32 %v2425, %v2459
    %2461 = vmatmul.f32.gmra.mxu0 %v2319
    %v2462 = vpop.f32.mrf.mxu0
    %v2463 = vadd.f32 %v2425, %v2462
    %2464 = vmatmul.f32.gmra.mxu0 %v2323
    %v2465 = vpop.f32.mrf.mxu0
    %v2466 = vadd.f32 %v2425, %v2465
    %2467 = vmatmul.f32.gmra.mxu0 %v2327
    %v2468 = vpop.f32.mrf.mxu0
    %v2469 = vadd.f32 %v2425, %v2468
    %2470 = vmatmul.f32.gmra.mxu0 %v2331
    %v2471 = vpop.f32.mrf.mxu0
    %v2472 = vadd.f32 %v2425, %v2471
    %2473 = vmatmul.f32.gmra.mxu0 %v2335
    %v2474 = vpop.f32.mrf.mxu0
    %v2475 = vadd.f32 %v2425, %v2474
    %2476 = vmatmul.f32.gmra.mxu0 %v2339
    %v2477 = vpop.f32.mrf.mxu0
    %v2478 = vadd.f32 %v2425, %v2477
    %2479 = vmatmul.f32.gmra.mxu0 %v2343
    %v2480 = vpop.f32.mrf.mxu0
    %v2481 = vadd.f32 %v2425, %v2480
    %2482 = vmatmul.f32.gmra.mxu0 %v2347
    %v2483 = vpop.f32.mrf.mxu0
    %v2484 = vadd.f32 %v2425, %v2483
    %2485 = vmatmul.f32.gmra.mxu0 %v2351
    %v2486 = vpop.f32.mrf.mxu0
    %v2487 = vadd.f32 %v2425, %v2486
    %2488 = vmatmul.f32.gmra.mxu0 %v2355
    %v2489 = vpop.f32.mrf.mxu0
    %v2490 = vadd.f32 %v2425, %v2489
    %2491 = vdwg.mxu0
    %2492 = vmatpush.msra.mxu0 %v2390
    %2493 = vmatpush.msra.mxu0 %v2389
    %2494 = vmatpush.msra.mxu0 %v2388
    %2495 = vmatpush.msra.mxu0 %v2387
    %2496 = vmatpush.msra.mxu0 %v2386
    %2497 = vmatpush.msra.mxu0 %v2385
    %2498 = vmatpush.msra.mxu0 %v2384
    %2499 = vmatpush.msra.mxu0 %v2383
    %2500 = vmatpush.msra.mxu0 %v2382
    %2501 = vmatpush.msra.mxu0 %v2381
    %2502 = vmatpush.msra.mxu0 %v2380
    %2503 = vmatpush.msra.mxu0 %v2379
    %2504 = vmatpush.msra.mxu0 %v2378
    %2505 = vmatpush.msra.mxu0 %v2377
    %2506 = vmatpush.msra.mxu0 %v2376
    %2507 = vmatpush.msra.mxu0 %v2375
    %2508 = vmatmul.f32.gmra.mxu0 %v2296
    %v2509 = vpop.f32.mrf.mxu0
    %v2510 = vadd.f32 %v2445, %v2509
    %2511 = vmatmul.f32.gmra.mxu0 %v2300
    %v2512 = vpop.f32.mrf.mxu0
    %v2513 = vadd.f32 %v2448, %v2512
    %2514 = vmatmul.f32.gmra.mxu0 %v2304
    %v2515 = vpop.f32.mrf.mxu0
    %v2516 = vadd.f32 %v2451, %v2515
    %2517 = vmatmul.f32.gmra.mxu0 %v2308
    %v2518 = vpop.f32.mrf.mxu0
    %v2519 = vadd.f32 %v2454, %v2518
    %2520 = vmatmul.f32.gmra.mxu0 %v2312
    %v2521 = vpop.f32.mrf.mxu0
    %v2522 = vadd.f32 %v2457, %v2521
    %2523 = vmatmul.f32.gmra.mxu0 %v2316
    %v2524 = vpop.f32.mrf.mxu0
    %v2525 = vadd.f32 %v2460, %v2524
    %2526 = vmatmul.f32.gmra.mxu0 %v2320
    %v2527 = vpop.f32.mrf.mxu0
    %v2528 = vadd.f32 %v2463, %v2527
    %2529 = vmatmul.f32.gmra.mxu0 %v2324
    %v2530 = vpop.f32.mrf.mxu0
    %v2531 = vadd.f32 %v2466, %v2530
    %2532 = vmatmul.f32.gmra.mxu0 %v2328
    %v2533 = vpop.f32.mrf.mxu0
    %v2534 = vadd.f32 %v2469, %v2533
    %2535 = vmatmul.f32.gmra.mxu0 %v2332
    %v2536 = vpop.f32.mrf.mxu0
    %v2537 = vadd.f32 %v2472, %v2536
    %2538 = vmatmul.f32.gmra.mxu0 %v2336
    %v2539 = vpop.f32.mrf.mxu0
    %v2540 = vadd.f32 %v2475, %v2539
    %2541 = vmatmul.f32.gmra.mxu0 %v2340
    %v2542 = vpop.f32.mrf.mxu0
    %v2543 = vadd.f32 %v2478, %v2542
    %2544 = vmatmul.f32.gmra.mxu0 %v2344
    %v2545 = vpop.f32.mrf.mxu0
    %v2546 = vadd.f32 %v2481, %v2545
    %2547 = vmatmul.f32.gmra.mxu0 %v2348
    %v2548 = vpop.f32.mrf.mxu0
    %v2549 = vadd.f32 %v2484, %v2548
    %2550 = vmatmul.f32.gmra.mxu0 %v2352
    %v2551 = vpop.f32.mrf.mxu0
    %v2552 = vadd.f32 %v2487, %v2551
    %2553 = vmatmul.f32.gmra.mxu0 %v2356
    %v2554 = vpop.f32.mrf.mxu0
    %v2555 = vadd.f32 %v2490, %v2554
    %2556 = vdwg.mxu0
    %2557 = vmatpush.msra.mxu0 %v2406
    %2558 = vmatpush.msra.mxu0 %v2405
    %2559 = vmatpush.msra.mxu0 %v2404
    %2560 = vmatpush.msra.mxu0 %v2403
    %2561 = vmatpush.msra.mxu0 %v2402
    %2562 = vmatpush.msra.mxu0 %v2401
    %2563 = vmatpush.msra.mxu0 %v2400
    %2564 = vmatpush.msra.mxu0 %v2399
    %2565 = vmatpush.msra.mxu0 %v2398
    %2566 = vmatpush.msra.mxu0 %v2397
    %2567 = vmatpush.msra.mxu0 %v2396
    %2568 = vmatpush.msra.mxu0 %v2395
    %2569 = vmatpush.msra.mxu0 %v2394
    %2570 = vmatpush.msra.mxu0 %v2393
    %2571 = vmatpush.msra.mxu0 %v2392
    %2572 = vmatpush.msra.mxu0 %v2391
    %2573 = vmatmul.f32.gmra.mxu0 %v2297
    %v2574 = vpop.f32.mrf.mxu0
    %v2575 = vadd.f32 %v2510, %v2574
    %2576 = vmatmul.f32.gmra.mxu0 %v2301
    %v2577 = vpop.f32.mrf.mxu0
    %v2578 = vadd.f32 %v2513, %v2577
    %2579 = vmatmul.f32.gmra.mxu0 %v2305
    %v2580 = vpop.f32.mrf.mxu0
    %v2581 = vadd.f32 %v2516, %v2580
    %2582 = vmatmul.f32.gmra.mxu0 %v2309
    %v2583 = vpop.f32.mrf.mxu0
    %v2584 = vadd.f32 %v2519, %v2583
    %2585 = vmatmul.f32.gmra.mxu0 %v2313
    %v2586 = vpop.f32.mrf.mxu0
    %v2587 = vadd.f32 %v2522, %v2586
    %2588 = vmatmul.f32.gmra.mxu0 %v2317
    %v2589 = vpop.f32.mrf.mxu0
    %v2590 = vadd.f32 %v2525, %v2589
    %2591 = vmatmul.f32.gmra.mxu0 %v2321
    %v2592 = vpop.f32.mrf.mxu0
    %v2593 = vadd.f32 %v2528, %v2592
    %2594 = vmatmul.f32.gmra.mxu0 %v2325
    %v2595 = vpop.f32.mrf.mxu0
    %v2596 = vadd.f32 %v2531, %v2595
    %2597 = vmatmul.f32.gmra.mxu0 %v2329
    %v2598 = vpop.f32.mrf.mxu0
    %v2599 = vadd.f32 %v2534, %v2598
    %2600 = vmatmul.f32.gmra.mxu0 %v2333
    %v2601 = vpop.f32.mrf.mxu0
    %v2602 = vadd.f32 %v2537, %v2601
    %2603 = vmatmul.f32.gmra.mxu0 %v2337
    %v2604 = vpop.f32.mrf.mxu0
    %v2605 = vadd.f32 %v2540, %v2604
    %2606 = vmatmul.f32.gmra.mxu0 %v2341
    %v2607 = vpop.f32.mrf.mxu0
    %v2608 = vadd.f32 %v2543, %v2607
    %2609 = vmatmul.f32.gmra.mxu0 %v2345
    %v2610 = vpop.f32.mrf.mxu0
    %v2611 = vadd.f32 %v2546, %v2610
    %2612 = vmatmul.f32.gmra.mxu0 %v2349
    %v2613 = vpop.f32.mrf.mxu0
    %v2614 = vadd.f32 %v2549, %v2613
    %2615 = vmatmul.f32.gmra.mxu0 %v2353
    %v2616 = vpop.f32.mrf.mxu0
    %v2617 = vadd.f32 %v2552, %v2616
    %2618 = vmatmul.f32.gmra.mxu0 %v2357
    %v2619 = vpop.f32.mrf.mxu0
    %v2620 = vadd.f32 %v2555, %v2619
    %2621 = vdwg.mxu0
    %2622 = vmatpush.msra.mxu0 %v2422
    %2623 = vmatpush.msra.mxu0 %v2421
    %2624 = vmatpush.msra.mxu0 %v2420
    %2625 = vmatpush.msra.mxu0 %v2419
    %2626 = vmatpush.msra.mxu0 %v2418
    %2627 = vmatpush.msra.mxu0 %v2417
    %2628 = vmatpush.msra.mxu0 %v2416
    %2629 = vmatpush.msra.mxu0 %v2415
    %2630 = vmatpush.msra.mxu0 %v2414
    %2631 = vmatpush.msra.mxu0 %v2413
    %2632 = vmatpush.msra.mxu0 %v2412
    %2633 = vmatpush.msra.mxu0 %v2411
    %2634 = vmatpush.msra.mxu0 %v2410
    %2635 = vmatpush.msra.mxu0 %v2409
    %2636 = vmatpush.msra.mxu0 %v2408
    %2637 = vmatpush.msra.mxu0 %v2407
    %2638 = vmatmul.f32.gmra.mxu0 %v2298
    %v2639 = vpop.f32.mrf.mxu0
    %v2640 = vadd.f32 %v2575, %v2639
    %2641 = vmatmul.f32.gmra.mxu0 %v2302
    %v2642 = vpop.f32.mrf.mxu0
    %v2643 = vadd.f32 %v2578, %v2642
    %2644 = vmatmul.f32.gmra.mxu0 %v2306
    %v2645 = vpop.f32.mrf.mxu0
    %v2646 = vadd.f32 %v2581, %v2645
    %2647 = vmatmul.f32.gmra.mxu0 %v2310
    %v2648 = vpop.f32.mrf.mxu0
    %v2649 = vadd.f32 %v2584, %v2648
    %2650 = vmatmul.f32.gmra.mxu0 %v2314
    %v2651 = vpop.f32.mrf.mxu0
    %v2652 = vadd.f32 %v2587, %v2651
    %2653 = vmatmul.f32.gmra.mxu0 %v2318
    %v2654 = vpop.f32.mrf.mxu0
    %v2655 = vadd.f32 %v2590, %v2654
    %2656 = vmatmul.f32.gmra.mxu0 %v2322
    %v2657 = vpop.f32.mrf.mxu0
    %v2658 = vadd.f32 %v2593, %v2657
    %2659 = vmatmul.f32.gmra.mxu0 %v2326
    %v2660 = vpop.f32.mrf.mxu0
    %v2661 = vadd.f32 %v2596, %v2660
    %2662 = vmatmul.f32.gmra.mxu0 %v2330
    %v2663 = vpop.f32.mrf.mxu0
    %v2664 = vadd.f32 %v2599, %v2663
    %2665 = vmatmul.f32.gmra.mxu0 %v2334
    %v2666 = vpop.f32.mrf.mxu0
    %v2667 = vadd.f32 %v2602, %v2666
    %2668 = vmatmul.f32.gmra.mxu0 %v2338
    %v2669 = vpop.f32.mrf.mxu0
    %v2670 = vadd.f32 %v2605, %v2669
    %2671 = vmatmul.f32.gmra.mxu0 %v2342
    %v2672 = vpop.f32.mrf.mxu0
    %v2673 = vadd.f32 %v2608, %v2672
    %2674 = vmatmul.f32.gmra.mxu0 %v2346
    %v2675 = vpop.f32.mrf.mxu0
    %v2676 = vadd.f32 %v2611, %v2675
    %2677 = vmatmul.f32.gmra.mxu0 %v2350
    %v2678 = vpop.f32.mrf.mxu0
    %v2679 = vadd.f32 %v2614, %v2678
    %2680 = vmatmul.f32.gmra.mxu0 %v2354
    %v2681 = vpop.f32.mrf.mxu0
    %v2682 = vadd.f32 %v2617, %v2681
    %2683 = vmatmul.f32.gmra.mxu0 %v2358
    %v2684 = vpop.f32.mrf.mxu0
    %v2685 = vadd.f32 %v2620, %v2684
    %2686 = vdwg.mxu0
    %2687 = vst [vmem:[%s7] sm:$0xff] %v2640
    %2688 = vst [vmem:[%s7 + $0x8] sm:$0xff] %v2643
    %2689 = vst [vmem:[%s7 + $0x10] sm:$0xff] %v2646
    %2690 = vst [vmem:[%s7 + $0x18] sm:$0xff] %v2649
    %2691 = vst [vmem:[%s7 + $0x20] sm:$0xff] %v2652
    %2692 = vst [vmem:[%s7 + $0x28] sm:$0xff] %v2655
    %2693 = vst [vmem:[%s7 + $0x30] sm:$0xff] %v2658
    %2694 = vst [vmem:[%s7 + $0x38] sm:$0xff] %v2661
    %2695 = vst [vmem:[%s7 + $0x40] sm:$0xff] %v2664
    %2696 = vst [vmem:[%s7 + $0x48] sm:$0xff] %v2667
    %2697 = vst [vmem:[%s7 + $0x50] sm:$0xff] %v2670
    %2698 = vst [vmem:[%s7 + $0x58] sm:$0xff] %v2673
    %2699 = vst [vmem:[%s7 + $0x60] sm:$0xff] %v2676
    %2700 = vst [vmem:[%s7 + $0x68] sm:$0xff] %v2679
    %2701 = vst [vmem:[%s7 + $0x70] sm:$0xff] %v2682
    %2702 = vst [vmem:[%s7 + $0x78] sm:$0xff] %v2685
    // Predicated region
    $region65: #{_lambda_.2} parent=1 // pred_check
      _
    $region66: #{_lambda_.2} parent=1 // pred_check_branch
      %2704 = sbr.rel (0) target = $region68
    $region67: #{_lambda_.2} parent=1 // pred_region
      _
    $region68: #{_lambda_.2} parent=1 // pred_fallthru
      _
    // Predicated region
    $region69: #{_lambda_.2} parent=1 // pred_check
      _
    $region70: #{_lambda_.2} parent=1 // pred_check_branch
      %2706 = sbr.rel (0) target = $region72
    $region71: #{_lambda_.2} parent=1 // pred_region
      _
    $region72: #{_lambda_.2} parent=1 // pred_fallthru
      _
    %2707 = vsyncpa [#allocation6], 1
    %2708 = vsyncpa [#allocation8], 1
    %2709 = vsyncpa [#allocation11], 1
  %2710 = vsyncmov [#allocation4]
  %s2711 = vpop.sfrf %2710
  %p2712 = scmp.eq.s32.totalorder %s2711, 0
  %p2713 = pneg %p2712
  %2715 = shalt.err (%p2713)
  %s2716 = scalar_lea.sflag [#allocation4], 1
  %2717 = vsyncmov %s2716
  %s2718 = vpop.sfrf %2717
  %p2719 = scmp.eq.s32.totalorder %s2718, 0
  %p2720 = pneg %p2719
  %2722 = shalt.err (%p2720)

</llo_original>
